<compile_context>
chip_gen: v6e
topology: v6e:2x2x1
jax: 0.10.0
libtpu: 0.0.40
codegen_flags: <defaults>
</compile_context>

<pallas_src>
import numpy as np

import jax
import jax.numpy as jnp
from jax.experimental import pallas as pl
from jax.experimental.pallas import tpu as pltpu


# ---------------------------------------------------------------------------
# Fused Pallas kernel: one batch element per grid step.
# ---------------------------------------------------------------------------
def _basic_block_kernel(x_ref, m1_ref, m2_ref, s1_ref, b1_ref, s2_ref, b2_ref,
                        o_ref):
    x2d = x_ref[0]                                   # (H, W*Cin) f32, lane-dense

    def conv3x3_rows(rows, m_ref):
        # rows: (H, W*C) f32.  Zero-pad one row above/below (the conv's H
        # halo); the W halo is already folded into the banded weight matrix.
        h = rows.shape[0]
        zrow = jnp.zeros((1, rows.shape[1]), rows.dtype)
        padded = jnp.concatenate([zrow, rows, zrow], axis=0)            # (H+2, W*C)
        # col[h] = [row h-1 | row h | row h+1]  ->  (H, 3*W*C), lane-aligned concat
        col = jnp.concatenate(
            [padded[0:h], padded[1:h + 1], padded[2:h + 2]], axis=1)
        # Single MXU matmul: bf16 operands, f32 accumulation.
        return jnp.dot(col.astype(jnp.bfloat16), m_ref[...],
                       preferred_element_type=jnp.float32)              # (H, W*Cout)

    y = conv3x3_rows(x2d, m1_ref)                    # conv1
    y = jnp.maximum(y * s1_ref[...] + b1_ref[...], 0.0)                 # BN1 + ReLU
    y = conv3x3_rows(y, m2_ref)                      # conv2 (intermediate stays on-chip)
    y = y * s2_ref[...] + b2_ref[...]                                   # BN2
    y = jnp.maximum(y + x2d, 0.0)                    # residual (f32) + ReLU
    o_ref[...] = y.reshape(o_ref.shape).astype(o_ref.dtype)


# ---------------------------------------------------------------------------
# One-time weight / BN repacking (host side).
# ---------------------------------------------------------------------------
def _band_conv_weights(w_hwio, W, dtype=jnp.bfloat16):
    """Fold a 3x3 HWIO conv kernel into a banded (3*W*Cin, W*Cout) matrix so
    the conv over the W axis (with SAME padding) becomes one matmul on
    (H, 3*W*Cin) row-stacks."""
    w = np.asarray(jax.device_get(w_hwio), np.float32)     # (3, 3, Cin, Cout)
    kh_n, kw_n, cin, cout = w.shape
    m = np.zeros((kh_n * W * cin, W * cout), np.float32)
    for kh in range(kh_n):
        for wo in range(W):
            for kw in range(kw_n):
                wi = wo + kw - 1                 # input column (SAME padding)
                if 0 <= wi < W:
                    r = (kh * W + wi) * cin
                    c = wo * cout
                    m[r:r + cin, c:c + cout] = w[kh, kw]
    return jnp.asarray(m, dtype)


def prepare_block_params(params, W):
    """Amortized (once per model) repack of conv weights + folded BN."""
    cout = params["w1"].shape[-1]

    def tile_c(v):
        return jnp.tile(v.astype(jnp.float32), W).reshape(1, W * cout)

    return {
        "m1": _band_conv_weights(params["w1"], W),
        "m2": _band_conv_weights(params["w2"], W),
        "s1": tile_c(params["bn1_scale"]),
        "b1": tile_c(params["bn1_shift"]),
        "s2": tile_c(params["bn2_scale"]),
        "b2": tile_c(params["bn2_shift"]),
    }


# ---------------------------------------------------------------------------
# Wrapper
# ---------------------------------------------------------------------------
def basic_block_forward(x, packed):
    """Fused Pallas implementation of basic_block.forward with down=None."""
    N, H, W, Cin = x.shape
    Cout = packed["m1"].shape[1] // W
    assert Cin == Cout, "down=None path requires inplanes == planes"

    x2d = x.reshape(N, H, W * Cin)                   # free layout change (row-major)
    wc_in, wc_out = W * Cin, W * Cout

    out2d = pl.pallas_call(
        _basic_block_kernel,
        out_shape=jax.ShapeDtypeStruct((N, H, wc_out), x.dtype),
        grid_spec=pltpu.PrefetchScalarGridSpec(
            num_scalar_prefetch=0,
            grid=(N,),
            in_specs=[
                pl.BlockSpec((1, H, wc_in), lambda n: (n, 0, 0)),
                pl.BlockSpec((3 * wc_in, wc_out), lambda n: (0, 0)),
                pl.BlockSpec((3 * wc_out, wc_out), lambda n: (0, 0)),
                pl.BlockSpec((1, wc_out), lambda n: (0, 0)),
                pl.BlockSpec((1, wc_out), lambda n: (0, 0)),
                pl.BlockSpec((1, wc_out), lambda n: (0, 0)),
                pl.BlockSpec((1, wc_out), lambda n: (0, 0)),
            ],
            out_specs=pl.BlockSpec((1, H, wc_out), lambda n: (n, 0, 0)),
        ),
        compiler_params=pltpu.CompilerParams(
            dimension_semantics=("parallel",),   # v7x: batch shards across both TCs
        ),
    )(x2d, packed["m1"], packed["m2"], packed["s1"], packed["b1"],
      packed["s2"], packed["b2"])
    # TODO(synk): for real ResNet sizes (e.g. 56x56x256) tile H into row strips
    # with a 1-row halo and set vmem_limit_bytes explicitly (v7x has 64 MiB VMEM).
    return out2d.reshape(N, H, W, Cout)


# ---------------------------------------------------------------------------
# Pure-JAX reference (for verification)
# ---------------------------------------------------------------------------
def _ref_conv3x3(x, w):
    return jax.lax.conv_general_dilated(
        x, w, window_strides=(1, 1), padding="SAME",
        dimension_numbers=("NHWC", "HWIO", "NHWC"))


def basic_block_reference(x, params, *, matmul_dtype=jnp.float32):
    def q(a):  # emulate the kernel's bf16 MXU operands (f32 accumulation)
        return a.astype(matmul_dtype).astype(jnp.float32)

    out = _ref_conv3x3(q(x), q(params["w1"]))
    out = jnp.maximum(out * params["bn1_scale"] + params["bn1_shift"], 0.0)
    out = _ref_conv3x3(q(out), q(params["w2"]))
    out = out * params["bn2_scale"] + params["bn2_shift"]
    out = out + x
    return jnp.maximum(out, 0.0)


# ---------------------------------------------------------------------------
# Parameter construction (deterministic, synthetic)
# ---------------------------------------------------------------------------
def make_params(inplanes, planes, key):
    ks = jax.random.split(key, 8)
    eps = 1e-5
    w1 = jax.random.normal(ks[0], (3, 3, inplanes, planes), jnp.float32) * 0.1
    w2 = jax.random.normal(ks[1], (3, 3, planes, planes), jnp.float32) * 0.1
    g1 = 1.0 + 0.1 * jax.random.normal(ks[2], (planes,), jnp.float32)
    b1 = 0.1 * jax.random.normal(ks[3], (planes,), jnp.float32)
    m1 = 0.1 * jax.random.normal(ks[4], (planes,), jnp.float32)
    v1 = jnp.abs(jax.random.normal(ks[5], (planes,), jnp.float32)) + 0.5
    g2 = 1.0 + 0.1 * jax.random.normal(ks[6], (planes,), jnp.float32)
    b2 = 0.1 * jax.random.normal(ks[7], (planes,), jnp.float32)
    m2 = jnp.zeros((planes,), jnp.float32)
    v2 = jnp.ones((planes,), jnp.float32)
    # Fold BN (inference mode) into per-channel scale / shift.
    s1 = g1 / jnp.sqrt(v1 + eps)
    s2 = g2 / jnp.sqrt(v2 + eps)
    return {
        "w1": w1, "w2": w2,
        "bn1_scale": s1, "bn1_shift": b1 - m1 * s1,
        "bn2_scale": s2, "bn2_shift": b2 - m2 * s2,
    }
    # TODO(synk): training-mode BatchNorm (batch statistics) and the stride-2 /
    # downsample branch (down is not None) are not implemented here.


# ---------------------------------------------------------------------------
if __name__ == "__main__":
    key = jax.random.PRNGKey(0)
    kx, kp = jax.random.split(key)

    N, H, W, C = 2, 16, 16, 16          # inplanes == planes == 16, down=None
    x = jax.random.normal(kx, (N, H, W, C), jnp.float32)
    params = make_params(C, C, kp)
    packed = prepare_block_params(params, W)

    out = jax.block_until_ready(basic_block_forward(x, packed))

    # Reference with the same bf16 matmul operands / f32 accumulation + epilogue.
    ref = basic_block_reference(x, params, matmul_dtype=jnp.bfloat16)
    assert out.shape == (N, H, W, C)
    assert jnp.allclose(out, ref, atol=5e-3, rtol=5e-3), "mismatch vs reference"

    print("KERNEL_OK")
</pallas_src>

<mosaic_0001>
module attributes {stable_mosaic.version = 11 : i64} {
  func.func @_basic_block_kernel(%arg0: i32, %arg1: memref<1x16x256xf32, #tpu.memory_space<vmem>>, %arg2: memref<768x256xbf16, #tpu.memory_space<vmem>>, %arg3: memref<768x256xbf16, #tpu.memory_space<vmem>>, %arg4: memref<1x256xf32, #tpu.memory_space<vmem>>, %arg5: memref<1x256xf32, #tpu.memory_space<vmem>>, %arg6: memref<1x256xf32, #tpu.memory_space<vmem>>, %arg7: memref<1x256xf32, #tpu.memory_space<vmem>>, %arg8: memref<1x16x256xf32, #tpu.memory_space<vmem>>) attributes {dimension_semantics = [#tpu.dimension_semantics<parallel>], iteration_bounds = array<i64: 2>, scalar_prefetch = 0 : i64, scratch_operands = 0 : i64, tpu.core_type = #tpu.core_type<tc>, window_params = [{transform_indices = @transform_0, window_bounds = array<i64: 1, 16, 256>}, {pipeline_mode = #tpu.pipeline_mode<synchronous>, transform_indices = @transform_1, window_bounds = array<i64: 768, 256>}, {pipeline_mode = #tpu.pipeline_mode<synchronous>, transform_indices = @transform_2, window_bounds = array<i64: 768, 256>}, {pipeline_mode = #tpu.pipeline_mode<synchronous>, transform_indices = @transform_3, window_bounds = array<i64: 1, 256>}, {pipeline_mode = #tpu.pipeline_mode<synchronous>, transform_indices = @transform_4, window_bounds = array<i64: 1, 256>}, {pipeline_mode = #tpu.pipeline_mode<synchronous>, transform_indices = @transform_5, window_bounds = array<i64: 1, 256>}, {pipeline_mode = #tpu.pipeline_mode<synchronous>, transform_indices = @transform_6, window_bounds = array<i64: 1, 256>}, {transform_indices = @transform_7, window_bounds = array<i64: 1, 16, 256>}]} {
    %c0 = arith.constant 0 : index
    %c0_0 = arith.constant 0 : index
    %c0_1 = arith.constant 0 : index
    %0 = vector.load %arg1[%c0, %c0_0, %c0_1] : memref<1x16x256xf32, #tpu.memory_space<vmem>>, vector<1x16x256xf32>
    %1 = vector.shape_cast %0 : vector<1x16x256xf32> to vector<16x256xf32>
    %cst = arith.constant 0.000000e+00 : f32
    %2 = vector.broadcast %cst : f32 to vector<1x256xf32>
    %3 = tpu.concatenate %2, %1, %2 in 0 : vector<1x256xf32>, vector<16x256xf32>, vector<1x256xf32> -> vector<18x256xf32>
    %4 = vector.extract_strided_slice %3 {offsets = [0, 0], sizes = [16, 256], strides = [1, 1]} : vector<18x256xf32> to vector<16x256xf32>
    %5 = vector.extract_strided_slice %3 {offsets = [1, 0], sizes = [16, 256], strides = [1, 1]} : vector<18x256xf32> to vector<16x256xf32>
    %6 = vector.extract_strided_slice %3 {offsets = [2, 0], sizes = [16, 256], strides = [1, 1]} : vector<18x256xf32> to vector<16x256xf32>
    %7 = tpu.concatenate %4, %5, %6 in 1 : vector<16x256xf32>, vector<16x256xf32>, vector<16x256xf32> -> vector<16x768xf32>
    %8 = arith.truncf %7 : vector<16x768xf32> to vector<16x768xbf16>
    %c0_2 = arith.constant 0 : index
    %c0_3 = arith.constant 0 : index
    %9 = vector.load %arg2[%c0_2, %c0_3] : memref<768x256xbf16, #tpu.memory_space<vmem>>, vector<768x256xbf16>
    %cst_4 = arith.constant dense<0.000000e+00> : vector<16x256xf32>
    %10 = tpu.matmul %8, %9, %cst_4 {dimension_numbers = #tpu.dot_dimension_numbers<[1], [0], [0], [1], [0, 0, 1, 1], [], []>} : vector<16x768xbf16>, vector<768x256xbf16>, vector<16x256xf32> -> vector<16x256xf32>
    %c0_5 = arith.constant 0 : index
    %c0_6 = arith.constant 0 : index
    %11 = vector.load %arg4[%c0_5, %c0_6] : memref<1x256xf32, #tpu.memory_space<vmem>>, vector<1x256xf32>
    %12 = vector.broadcast %11 : vector<1x256xf32> to vector<16x256xf32>
    %13 = arith.mulf %10, %12 : vector<16x256xf32>
    %c0_7 = arith.constant 0 : index
    %c0_8 = arith.constant 0 : index
    %14 = vector.load %arg5[%c0_7, %c0_8] : memref<1x256xf32, #tpu.memory_space<vmem>>, vector<1x256xf32>
    %15 = vector.broadcast %14 : vector<1x256xf32> to vector<16x256xf32>
    %16 = arith.addf %13, %15 : vector<16x256xf32>
    %cst_9 = arith.constant 0.000000e+00 : f32
    %17 = vector.broadcast %cst_9 : f32 to vector<16x256xf32>
    %18 = arith.maximumf %16, %17 : vector<16x256xf32>
    %cst_10 = arith.constant 0.000000e+00 : f32
    %19 = vector.broadcast %cst_10 : f32 to vector<1x256xf32>
    %20 = tpu.concatenate %19, %18, %19 in 0 : vector<1x256xf32>, vector<16x256xf32>, vector<1x256xf32> -> vector<18x256xf32>
    %21 = vector.extract_strided_slice %20 {offsets = [0, 0], sizes = [16, 256], strides = [1, 1]} : vector<18x256xf32> to vector<16x256xf32>
    %22 = vector.extract_strided_slice %20 {offsets = [1, 0], sizes = [16, 256], strides = [1, 1]} : vector<18x256xf32> to vector<16x256xf32>
    %23 = vector.extract_strided_slice %20 {offsets = [2, 0], sizes = [16, 256], strides = [1, 1]} : vector<18x256xf32> to vector<16x256xf32>
    %24 = tpu.concatenate %21, %22, %23 in 1 : vector<16x256xf32>, vector<16x256xf32>, vector<16x256xf32> -> vector<16x768xf32>
    %25 = arith.truncf %24 : vector<16x768xf32> to vector<16x768xbf16>
    %c0_11 = arith.constant 0 : index
    %c0_12 = arith.constant 0 : index
    %26 = vector.load %arg3[%c0_11, %c0_12] : memref<768x256xbf16, #tpu.memory_space<vmem>>, vector<768x256xbf16>
    %cst_13 = arith.constant dense<0.000000e+00> : vector<16x256xf32>
    %27 = tpu.matmul %25, %26, %cst_13 {dimension_numbers = #tpu.dot_dimension_numbers<[1], [0], [0], [1], [0, 0, 1, 1], [], []>} : vector<16x768xbf16>, vector<768x256xbf16>, vector<16x256xf32> -> vector<16x256xf32>
    %c0_14 = arith.constant 0 : index
    %c0_15 = arith.constant 0 : index
    %28 = vector.load %arg6[%c0_14, %c0_15] : memref<1x256xf32, #tpu.memory_space<vmem>>, vector<1x256xf32>
    %29 = vector.broadcast %28 : vector<1x256xf32> to vector<16x256xf32>
    %30 = arith.mulf %27, %29 : vector<16x256xf32>
    %c0_16 = arith.constant 0 : index
    %c0_17 = arith.constant 0 : index
    %31 = vector.load %arg7[%c0_16, %c0_17] : memref<1x256xf32, #tpu.memory_space<vmem>>, vector<1x256xf32>
    %32 = vector.broadcast %31 : vector<1x256xf32> to vector<16x256xf32>
    %33 = arith.addf %30, %32 : vector<16x256xf32>
    %34 = arith.addf %33, %1 : vector<16x256xf32>
    %cst_18 = arith.constant 0.000000e+00 : f32
    %35 = vector.broadcast %cst_18 : f32 to vector<16x256xf32>
    %36 = arith.maximumf %34, %35 : vector<16x256xf32>
    %37 = vector.shape_cast %36 : vector<16x256xf32> to vector<1x16x256xf32>
    %c0_19 = arith.constant 0 : index
    %c0_20 = arith.constant 0 : index
    %c0_21 = arith.constant 0 : index
    %38 = vector.load %arg8[%c0_19, %c0_20, %c0_21] : memref<1x16x256xf32, #tpu.memory_space<vmem>>, vector<1x16x256xf32>
    tpu.vector_store %arg8[%c0_19, %c0_20, %c0_21], %37 {strides = array<i32>} : memref<1x16x256xf32, #tpu.memory_space<vmem>>, vector<1x16x256xf32>,
    return
  }
  func.func @transform_0(%arg0: i32) -> (i32, i32, i32) {
    %c0_i32 = arith.constant 0 : i32
    %c0_i32_0 = arith.constant 0 : i32
    %c0_i32_1 = arith.constant 0 : i32
    return %arg0, %c0_i32, %c0_i32_0 : i32, i32, i32
  }
  func.func @transform_1(%arg0: i32) -> (i32, i32) {
    %c0_i32 = arith.constant 0 : i32
    %c0_i32_0 = arith.constant 0 : i32
    %c0_i32_1 = arith.constant 0 : i32
    return %c0_i32, %c0_i32_0 : i32, i32
  }
  func.func @transform_2(%arg0: i32) -> (i32, i32) {
    %c0_i32 = arith.constant 0 : i32
    %c0_i32_0 = arith.constant 0 : i32
    %c0_i32_1 = arith.constant 0 : i32
    return %c0_i32, %c0_i32_0 : i32, i32
  }
  func.func @transform_3(%arg0: i32) -> (i32, i32) {
    %c0_i32 = arith.constant 0 : i32
    %c0_i32_0 = arith.constant 0 : i32
    %c0_i32_1 = arith.constant 0 : i32
    return %c0_i32, %c0_i32_0 : i32, i32
  }
  func.func @transform_4(%arg0: i32) -> (i32, i32) {
    %c0_i32 = arith.constant 0 : i32
    %c0_i32_0 = arith.constant 0 : i32
    %c0_i32_1 = arith.constant 0 : i32
    return %c0_i32, %c0_i32_0 : i32, i32
  }
  func.func @transform_5(%arg0: i32) -> (i32, i32) {
    %c0_i32 = arith.constant 0 : i32
    %c0_i32_0 = arith.constant 0 : i32
    %c0_i32_1 = arith.constant 0 : i32
    return %c0_i32, %c0_i32_0 : i32, i32
  }
  func.func @transform_6(%arg0: i32) -> (i32, i32) {
    %c0_i32 = arith.constant 0 : i32
    %c0_i32_0 = arith.constant 0 : i32
    %c0_i32_1 = arith.constant 0 : i32
    return %c0_i32, %c0_i32_0 : i32, i32
  }
  func.func @transform_7(%arg0: i32) -> (i32, i32, i32) {
    %c0_i32 = arith.constant 0 : i32
    %c0_i32_0 = arith.constant 0 : i32
    %c0_i32_1 = arith.constant 0 : i32
    return %arg0, %c0_i32, %c0_i32_0 : i32, i32, i32
  }
}

</mosaic_0001>

<llo_original>
// kernel: tpu_custom_call.1
$region0: #{tpu_custom_call.1}
  #allocation0 [shape = 'u32[]', space=smem, size = 0x4, offset = 0x4, fixed_abs, tag = 'smem constant byte address 0x4 - core index']
  #allocation1 [shape = 'u32[144,128]{1,0:T(1,128)}', space=vmem, size = 0x12000, scoped, tag = 'internal scratch']
  %s0 = inlined_call_operand.hbm [shape: f32[2,16,256], index: 0, kind: input, shape index: {}]
  %s1 = inlined_call_operand.hbm [shape: bf16[768,256], index: 1, kind: input, shape index: {}]
  %s2 = inlined_call_operand.hbm [shape: bf16[768,256], index: 2, kind: input, shape index: {}]
  %s3 = inlined_call_operand.vmem [shape: f32[1,256], index: 3, kind: input, shape index: {}]
  %s4 = inlined_call_operand.vmem [shape: f32[1,256], index: 4, kind: input, shape index: {}]
  %s5 = inlined_call_operand.vmem [shape: f32[1,256], index: 5, kind: input, shape index: {}]
  %s6 = inlined_call_operand.vmem [shape: f32[1,256], index: 6, kind: input, shape index: {}]
  %s7 = inlined_call_operand.hbm [shape: f32[2,16,256], index: 7, kind: output, shape index: {}]
  %s8 = sld [smem:[#allocation0]]
  $region73: #{tpu_custom_call.1} parent=0
    _
  %s10 = ssub.s32 1, %s8
  %s11 = scalar_select 0, %s10, %s8
  $region1: #{tpu_custom_call.1} parent=0
    #allocation2 [shape = 'u8[32768]{0}', space=vmem, size = 0x8000, scoped, tag = 'input window, operand 0']
    #allocation3 [shape = 's32[2]{0}', space=sflag, size = 0x8, scoped, tag = 'scoped memory for tpu_custom_call.1']
    #allocation4 [shape = 's32[2]{0}', space=sflag, size = 0x8, scoped, tag = 'scoped memory for tpu_custom_call.1']
    #allocation5 [shape = 'u8[393216]{0}', space=vmem, size = 0x60000, scoped, tag = 'input window, operand 1, single buffered']
    #allocation6 [shape = 's32[1]{0}', space=sflag, size = 0x4, scoped, tag = 'scoped memory for tpu_custom_call.1']
    #allocation7 [shape = 'u8[393216]{0}', space=vmem, size = 0x60000, scoped, tag = 'input window, operand 2, single buffered']
    #allocation8 [shape = 'u8[32768]{0}', space=vmem, size = 0x8000, scoped, tag = 'output window, operand 0']
    %12 = vsyncpa [#allocation3], 0
    %s13 = scalar_lea.sflag [#allocation3], 1
    %14 = vsyncpa %s13, 0
    %15 = vsyncpa [#allocation6], 0
    %16 = vsyncpa [#allocation4], 0
    %s17 = scalar_lea.sflag [#allocation4], 1
    %18 = vsyncpa %s17, 0
    loop: start=0, step=1, limit=4
    $region2: #{tpu_custom_call.1} parent=1 // loop_pre_header
      _
    $region3: #{tpu_custom_call.1} parent=1 // loop_header
      %s20 = sphi 0, %s24
      %p21 = scmp.ge.s32.totalorder %s20, 4
      %s30 = sphi 0, %s32
      %s33 = sphi 0, %s30
      %s34 = sphi 0, %s33
      %s50 = sphi 0, %s34
      %s54 = sphi 0, %s54
      %s56 = sphi 0, %s54
      %s57 = sphi 0, %s56
      %s71 = sphi 0, %s57
      %s75 = sphi 0, %s75
      %s77 = sphi 0, %s75
      %s78 = sphi 0, %s77
      %s92 = sphi 0, %s78
      %s96 = sphi 0, %s96
      %s98 = sphi 0, %s96
      %s99 = sphi 0, %s98
      %s113 = sphi 0, %s99
      %s117 = sphi 0, %s117
      %s119 = sphi 0, %s117
      %s120 = sphi 0, %s119
      %s134 = sphi 0, %s120
      %s138 = sphi 0, %s138
      %s140 = sphi 0, %s138
      %s141 = sphi 0, %s140
      %s155 = sphi 0, %s141
      %s159 = sphi 0, %s159
      %s161 = sphi 0, %s159
      %s162 = sphi 0, %s161
      %s176 = sphi 0, %s162
      %s182 = sphi 0, %s184
      %s185 = sphi 0, %s182
      %s186 = sphi 0, %s185
      %s202 = sphi 0, %s186
    $region4: #{tpu_custom_call.1} parent=1 // loop_header_branch
      %23 = sbr.rel (%p21) target = $region8
    $region5: #{tpu_custom_call.1} parent=1 // loop_body
      %s25 = ssub.s32 %s20, 1
      %s26 = ssub.s32 %s20, 2
      %s27 = sadd.s32 %s20, 1
      %s28 = ssub.s32 %s20, %s27
      %p29 = scmp.eq.s32.totalorder %s28, 0
      %s31 = sadd.s32 %s30, 1
      %s32 = scalar_select %p29, %s30, %s31
      %p35 = pneg %p29
      %p36 = scmp.eq.s32.totalorder %s20, 1
      %p37 = por %p35, %p36
      %p38 = scmp.ne.s32.totalorder %s30, %s33
      %p39 = scmp.eq.s32.totalorder %s20, 0
      %p40 = por %p38, %p39
      %p41 = scmp.ne.s32.totalorder %s30, %s33
      %p42 = scmp.eq.s32.totalorder %s25, 1
      %p43 = por %p41, %p42
      %p44 = scmp.ne.s32.totalorder %s33, %s34
      %p45 = scmp.eq.s32.totalorder %s25, 0
      %p46 = por %p44, %p45
      %p47 = scmp.ne.s32.totalorder %s33, %s34
      %p48 = scmp.eq.s32.totalorder %s26, 1
      %p49 = por %p47, %p48
      %p51 = scmp.ne.s32.totalorder %s34, %s50
      %p52 = scmp.eq.s32.totalorder %s26, 0
      %p53 = por %p51, %p52
      %s55 = sadd.s32 %s54, 1
      %p58 = scmp.eq.s32.totalorder %s20, 1
      %p59 = scmp.ne.s32.totalorder %s54, %s56
      %p60 = scmp.eq.s32.totalorder %s20, 0
      %p61 = por %p59, %p60
      %p62 = scmp.ne.s32.totalorder %s54, %s56
      %p63 = scmp.eq.s32.totalorder %s25, 1
      %p64 = por %p62, %p63
      %p65 = scmp.ne.s32.totalorder %s56, %s57
      %p66 = scmp.eq.s32.totalorder %s25, 0
      %p67 = por %p65, %p66
      %p68 = scmp.ne.s32.totalorder %s56, %s57
      %p69 = scmp.eq.s32.totalorder %s26, 1
      %p70 = por %p68, %p69
      %p72 = scmp.ne.s32.totalorder %s57, %s71
      %p73 = scmp.eq.s32.totalorder %s26, 0
      %p74 = por %p72, %p73
      %s76 = sadd.s32 %s75, 1
      %p79 = scmp.eq.s32.totalorder %s20, 1
      %p80 = scmp.ne.s32.totalorder %s75, %s77
      %p81 = scmp.eq.s32.totalorder %s20, 0
      %p82 = por %p80, %p81
      %p83 = scmp.ne.s32.totalorder %s75, %s77
      %p84 = scmp.eq.s32.totalorder %s25, 1
      %p85 = por %p83, %p84
      %p86 = scmp.ne.s32.totalorder %s77, %s78
      %p87 = scmp.eq.s32.totalorder %s25, 0
      %p88 = por %p86, %p87
      %p89 = scmp.ne.s32.totalorder %s77, %s78
      %p90 = scmp.eq.s32.totalorder %s26, 1
      %p91 = por %p89, %p90
      %p93 = scmp.ne.s32.totalorder %s78, %s92
      %p94 = scmp.eq.s32.totalorder %s26, 0
      %p95 = por %p93, %p94
      %s97 = sadd.s32 %s96, 1
      %p100 = scmp.eq.s32.totalorder %s20, 1
      %p101 = scmp.ne.s32.totalorder %s96, %s98
      %p102 = scmp.eq.s32.totalorder %s20, 0
      %p103 = por %p101, %p102
      %p104 = scmp.ne.s32.totalorder %s96, %s98
      %p105 = scmp.eq.s32.totalorder %s25, 1
      %p106 = por %p104, %p105
      %p107 = scmp.ne.s32.totalorder %s98, %s99
      %p108 = scmp.eq.s32.totalorder %s25, 0
      %p109 = por %p107, %p108
      %p110 = scmp.ne.s32.totalorder %s98, %s99
      %p111 = scmp.eq.s32.totalorder %s26, 1
      %p112 = por %p110, %p111
      %p114 = scmp.ne.s32.totalorder %s99, %s113
      %p115 = scmp.eq.s32.totalorder %s26, 0
      %p116 = por %p114, %p115
      %s118 = sadd.s32 %s117, 1
      %p121 = scmp.eq.s32.totalorder %s20, 1
      %p122 = scmp.ne.s32.totalorder %s117, %s119
      %p123 = scmp.eq.s32.totalorder %s20, 0
      %p124 = por %p122, %p123
      %p125 = scmp.ne.s32.totalorder %s117, %s119
      %p126 = scmp.eq.s32.totalorder %s25, 1
      %p127 = por %p125, %p126
      %p128 = scmp.ne.s32.totalorder %s119, %s120
      %p129 = scmp.eq.s32.totalorder %s25, 0
      %p130 = por %p128, %p129
      %p131 = scmp.ne.s32.totalorder %s119, %s120
      %p132 = scmp.eq.s32.totalorder %s26, 1
      %p133 = por %p131, %p132
      %p135 = scmp.ne.s32.totalorder %s120, %s134
      %p136 = scmp.eq.s32.totalorder %s26, 0
      %p137 = por %p135, %p136
      %s139 = sadd.s32 %s138, 1
      %p142 = scmp.eq.s32.totalorder %s20, 1
      %p143 = scmp.ne.s32.totalorder %s138, %s140
      %p144 = scmp.eq.s32.totalorder %s20, 0
      %p145 = por %p143, %p144
      %p146 = scmp.ne.s32.totalorder %s138, %s140
      %p147 = scmp.eq.s32.totalorder %s25, 1
      %p148 = por %p146, %p147
      %p149 = scmp.ne.s32.totalorder %s140, %s141
      %p150 = scmp.eq.s32.totalorder %s25, 0
      %p151 = por %p149, %p150
      %p152 = scmp.ne.s32.totalorder %s140, %s141
      %p153 = scmp.eq.s32.totalorder %s26, 1
      %p154 = por %p152, %p153
      %p156 = scmp.ne.s32.totalorder %s141, %s155
      %p157 = scmp.eq.s32.totalorder %s26, 0
      %p158 = por %p156, %p157
      %s160 = sadd.s32 %s159, 1
      %p163 = scmp.eq.s32.totalorder %s20, 1
      %p164 = scmp.ne.s32.totalorder %s159, %s161
      %p165 = scmp.eq.s32.totalorder %s20, 0
      %p166 = por %p164, %p165
      %p167 = scmp.ne.s32.totalorder %s159, %s161
      %p168 = scmp.eq.s32.totalorder %s25, 1
      %p169 = por %p167, %p168
      %p170 = scmp.ne.s32.totalorder %s161, %s162
      %p171 = scmp.eq.s32.totalorder %s25, 0
      %p172 = por %p170, %p171
      %p173 = scmp.ne.s32.totalorder %s161, %s162
      %p174 = scmp.eq.s32.totalorder %s26, 1
      %p175 = por %p173, %p174
      %p177 = scmp.ne.s32.totalorder %s162, %s176
      %p178 = scmp.eq.s32.totalorder %s26, 0
      %p179 = por %p177, %p178
      %s180 = ssub.s32 %s20, %s27
      %p181 = scmp.eq.s32.totalorder %s180, 0
      %s183 = sadd.s32 %s182, 1
      %s184 = scalar_select %p181, %s182, %s183
      %p187 = pneg %p181
      %p188 = scmp.eq.s32.totalorder %s20, 1
      %p189 = por %p187, %p188
      %p190 = scmp.ne.s32.totalorder %s182, %s185
      %p191 = scmp.eq.s32.totalorder %s20, 0
      %p192 = por %p190, %p191
      %p193 = scmp.ne.s32.totalorder %s182, %s185
      %p194 = scmp.eq.s32.totalorder %s25, 1
      %p195 = por %p193, %p194
      %p196 = scmp.ne.s32.totalorder %s185, %s186
      %p197 = scmp.eq.s32.totalorder %s25, 0
      %p198 = por %p196, %p197
      %p199 = scmp.ne.s32.totalorder %s185, %s186
      %p200 = scmp.eq.s32.totalorder %s26, 1
      %p201 = por %p199, %p200
      %p203 = scmp.ne.s32.totalorder %s186, %s202
      %p204 = scmp.eq.s32.totalorder %s26, 0
      %p205 = por %p203, %p204
      %p206 = scmp.le.s32.totalorder 1, %s20
      %p207 = scmp.lt.s32.totalorder %s20, 3
      %p208 = pnand %p206, %p207
      %p209 = pneg %p208
      // Predicated region
      $region9: #{tpu_custom_call.1} parent=5 // pred_check
        _
      $region10: #{tpu_custom_call.1} parent=5 // pred_check_branch
        %211 = sbr.rel (%p208) target = $region12
      $region11: #{tpu_custom_call.1} parent=5 // pred_region
        %s212 = ssub.s32 %s20, 1
        // Predicated region
        $region13: #{tpu_custom_call.1} parent=11 // pred_check
          %p213 = pneg %p67
        $region14: #{tpu_custom_call.1} parent=11 // pred_check_branch
          %215 = sbr.rel (%p213) target = $region16
        $region15: #{tpu_custom_call.1} parent=11 // pred_region
          %s217 = ssub.s32 12288, 12288
          %218 = vsyncadd [#allocation6], %s217
          %s219 = sshll.u32 [#allocation5], 4
          %s220 = int_to_ptr.vmem [resolvable:$true] %s219
          %225 = dma.hbm_to_vmem [thread:$0]  %s1, 12288, %s220, [#allocation6], 128, 128, 8
        $region16: #{tpu_custom_call.1} parent=11 // pred_fallthru
          _
        // Predicated region
        $region17: #{tpu_custom_call.1} parent=11 // pred_check
          %p226 = pneg %p88
        $region18: #{tpu_custom_call.1} parent=11 // pred_check_branch
          %228 = sbr.rel (%p226) target = $region20
        $region19: #{tpu_custom_call.1} parent=11 // pred_region
          %s230 = ssub.s32 12288, 12288
          %231 = vsyncadd [#allocation6], %s230
          %s232 = sshll.u32 [#allocation7], 4
          %s233 = int_to_ptr.vmem [resolvable:$true] %s232
          %238 = dma.hbm_to_vmem [thread:$0]  %s2, 12288, %s233, [#allocation6], 128, 128, 8
        $region20: #{tpu_custom_call.1} parent=11 // pred_fallthru
          _
        // Predicated region
        $region21: #{tpu_custom_call.1} parent=11 // pred_check
          %p239 = pneg %p109
        $region22: #{tpu_custom_call.1} parent=11 // pred_check_branch
          %241 = sbr.rel (%p239) target = $region24
        $region23: #{tpu_custom_call.1} parent=11 // pred_region
          _
        $region24: #{tpu_custom_call.1} parent=11 // pred_fallthru
          _
        // Predicated region
        $region25: #{tpu_custom_call.1} parent=11 // pred_check
          %p242 = pneg %p130
        $region26: #{tpu_custom_call.1} parent=11 // pred_check_branch
          %244 = sbr.rel (%p242) target = $region28
        $region27: #{tpu_custom_call.1} parent=11 // pred_region
          _
        $region28: #{tpu_custom_call.1} parent=11 // pred_fallthru
          _
        // Predicated region
        $region29: #{tpu_custom_call.1} parent=11 // pred_check
          %p245 = pneg %p151
        $region30: #{tpu_custom_call.1} parent=11 // pred_check_branch
          %247 = sbr.rel (%p245) target = $region32
        $region31: #{tpu_custom_call.1} parent=11 // pred_region
          _
        $region32: #{tpu_custom_call.1} parent=11 // pred_fallthru
          _
        // Predicated region
        $region33: #{tpu_custom_call.1} parent=11 // pred_check
          %p248 = pneg %p172
        $region34: #{tpu_custom_call.1} parent=11 // pred_check_branch
          %250 = sbr.rel (%p248) target = $region36
        $region35: #{tpu_custom_call.1} parent=11 // pred_region
          _
        $region36: #{tpu_custom_call.1} parent=11 // pred_fallthru
          _
      $region12: #{tpu_custom_call.1} parent=5 // pred_fallthru
        _
      %p251 = scmp.lt.s32.totalorder %s20, 2
      // Predicated region
      $region37: #{tpu_custom_call.1} parent=5 // pred_check
        %p252 = pneg %p251
      $region38: #{tpu_custom_call.1} parent=5 // pred_check_branch
        %254 = sbr.rel (%p252) target = $region40
      $region39: #{tpu_custom_call.1} parent=5 // pred_region
        // Predicated region
        $region41: #{tpu_custom_call.1} parent=39 // pred_check
          %p255 = pneg %p40
        $region42: #{tpu_custom_call.1} parent=39 // pred_check_branch
          %257 = sbr.rel (%p255) target = $region44
        $region43: #{tpu_custom_call.1} parent=39 // pred_region
          %s258 = sand.u32 %s30, 1
          %s259 = scalar_lea.sflag [#allocation3], %s258
          %s260 = sand.u32 %s30, 1
          %s261 = smul.addr %s260, 32
          %s262 = scalar_lea.vmem [#allocation2], %s261
          %s264 = ssub.s32 512, 512
          %265 = vsyncadd %s259, %s264
          %s266 = smul.addr %s20, 4
          %s267 = smul.addr %s266, 128
          %s268 = scalar_lea.hbm %s0, %s267
          %s269 = sshll.u32 %s262, 4
          %s270 = int_to_ptr.vmem [resolvable:$true] %s269
          %275 = dma.hbm_to_vmem [thread:$0]  %s268, 512, %s270, %s259, 256, 256, 16
        $region44: #{tpu_custom_call.1} parent=39 // pred_fallthru
          _
      $region40: #{tpu_custom_call.1} parent=5 // pred_fallthru
        _
      %p276 = scmp.le.s32.totalorder 1, %s20
      %p277 = scmp.lt.s32.totalorder %s20, 3
      %p278 = pnand %p276, %p277
      %p279 = pneg %p278
      // Predicated region
      $region45: #{tpu_custom_call.1} parent=5 // pred_check
        _
      $region46: #{tpu_custom_call.1} parent=5 // pred_check_branch
        %281 = sbr.rel (%p278) target = $region48
      $region47: #{tpu_custom_call.1} parent=5 // pred_region
        %s282 = ssub.s32 %s20, 1
        %s283 = sand.u32 %s33, 1
        %s284 = scalar_lea.sflag [#allocation3], %s283
        %s285 = sand.u32 %s33, 1
        %s286 = smul.addr %s285, 32
        %s287 = scalar_lea.vmem [#allocation2], %s286
        // Predicated region
        $region49: #{tpu_custom_call.1} parent=47 // pred_check
          %p288 = pneg %p46
        $region50: #{tpu_custom_call.1} parent=47 // pred_check_branch
          %290 = sbr.rel (%p288) target = $region52
        $region51: #{tpu_custom_call.1} parent=47 // pred_region
          %291 = dma.done %s284, 512
        $region52: #{tpu_custom_call.1} parent=47 // pred_fallthru
          _
        // Predicated region
        $region53: #{tpu_custom_call.1} parent=47 // pred_check
          %p292 = pneg %p67
        $region54: #{tpu_custom_call.1} parent=47 // pred_check_branch
          %294 = sbr.rel (%p292) target = $region56
        $region55: #{tpu_custom_call.1} parent=47 // pred_region
          %295 = dma.done [#allocation6], 12288
        $region56: #{tpu_custom_call.1} parent=47 // pred_fallthru
          _
        // Predicated region
        $region57: #{tpu_custom_call.1} parent=47 // pred_check
          %p296 = pneg %p88
        $region58: #{tpu_custom_call.1} parent=47 // pred_check_branch
          %298 = sbr.rel (%p296) target = $region60
        $region59: #{tpu_custom_call.1} parent=47 // pred_region
          %299 = dma.done [#allocation6], 12288
        $region60: #{tpu_custom_call.1} parent=47 // pred_fallthru
          _
        %s300 = sand.u32 %s33, 1
        %s301 = scalar_lea.sflag [#allocation3], %s300
        %s302 = sand.u32 %s33, 1
        %s303 = smul.addr %s302, 32
        %s304 = scalar_lea.vmem [#allocation2], %s303
        %p305 = pneg %p46
        %p306 = pneg %p43
        %p307 = pneg %p67
        %p308 = pneg %p64
        %p309 = pneg %p88
        %p310 = pneg %p85
        %p311 = pneg %p109
        %p312 = pneg %p106
        %p313 = pneg %p130
        %p314 = pneg %p127
        %p315 = pneg %p151
        %p316 = pneg %p148
        %p317 = pneg %p172
        %p318 = pneg %p169
        %p319 = pneg %p198
        %p320 = pneg %p195
        %s321 = sand.u32 %s185, 1
        %s322 = scalar_lea.sflag [#allocation4], %s321
        %s323 = sand.u32 %s185, 1
        %s324 = smul.addr %s323, 32
        %s325 = scalar_lea.vmem [#allocation8], %s324
        %v326 = vld [vmem:[%s287] sm:$0xff]
        %v327 = vld [vmem:[%s287 + $0x8] sm:$0xff]
        %v328 = vld [vmem:[%s287 + $0x10] sm:$0xff]
        %v329 = vld [vmem:[%s287 + $0x18] sm:$0xff]
        %vm334 = vcmask 1040384
        %v335 = vrot.slane %v326, 7
        %v336 = vrot.slane %v327, 7
        %v337 = vrot.slane %v328, 7
        %v338 = vsel %vm334, %v335, %v337
        %v339 = vrot.slane %v329, 7
        %v340 = vsel %vm334, %v336, %v339
        %v347 = vsel %vm334, 0.0, %v335
        %v348 = vsel %vm334, 0.0, %v336
        %v349 = vsel %vm334, %v337, 0.0
        %v350 = vsel %vm334, %v339, 0.0
        %vm355 = vcmask 1046528
        %v356 = vrot.slane %v347, 1
        %v357 = vrot.slane %v338, 1
        %v358 = vsel %vm355, %v356, %v357
        %v359 = vrot.slane %v348, 1
        %v360 = vrot.slane %v340, 1
        %v361 = vsel %vm355, %v359, %v360
        %v362 = vrot.slane %v349, 1
        %v363 = vsel %vm355, %v357, %v362
        %v364 = vrot.slane %v350, 1
        %v365 = vsel %vm355, %v360, %v364
        %vm370 = vcmask 1045504
        %v371 = vrot.slane %v347, 2
        %v372 = vrot.slane %v338, 2
        %v373 = vsel %vm370, %v371, %v372
        %v374 = vrot.slane %v348, 2
        %v375 = vrot.slane %v340, 2
        %v376 = vsel %vm370, %v374, %v375
        %v377 = vrot.slane %v349, 2
        %v378 = vsel %vm370, %v372, %v377
        %v379 = vrot.slane %v350, 2
        %v380 = vsel %vm370, %v375, %v379
        %v385 = vpack.c.bf16 %v338, %v347
        %v386 = vpack.c.bf16 %v340, %v348
        %v387 = vpack.c.bf16 %v363, %v358
        %v388 = vpack.c.bf16 %v365, %v361
        %v389 = vpack.c.bf16 %v378, %v373
        %v390 = vpack.c.bf16 %v380, %v376
        %v391 = vld [vmem:[#allocation5] sm:$0xff]
        %v392 = vld [vmem:[#allocation5 + $0x8] sm:$0xff]
        %v393 = vld [vmem:[#allocation5 + $0x10] sm:$0xff]
        %v394 = vld [vmem:[#allocation5 + $0x18] sm:$0xff]
        %v395 = vld [vmem:[#allocation5 + $0x20] sm:$0xff]
        %v396 = vld [vmem:[#allocation5 + $0x28] sm:$0xff]
        %v397 = vld [vmem:[#allocation5 + $0x30] sm:$0xff]
        %v398 = vld [vmem:[#allocation5 + $0x38] sm:$0xff]
        %v399 = vld [vmem:[#allocation5 + $0x40] sm:$0xff]
        %v400 = vld [vmem:[#allocation5 + $0x48] sm:$0xff]
        %v401 = vld [vmem:[#allocation5 + $0x50] sm:$0xff]
        %v402 = vld [vmem:[#allocation5 + $0x58] sm:$0xff]
        %v403 = vld [vmem:[#allocation5 + $0x60] sm:$0xff]
        %v404 = vld [vmem:[#allocation5 + $0x68] sm:$0xff]
        %v405 = vld [vmem:[#allocation5 + $0x70] sm:$0xff]
        %v406 = vld [vmem:[#allocation5 + $0x78] sm:$0xff]
        %v407 = vld [vmem:[#allocation5 + $0x80] sm:$0xff]
        %v408 = vld [vmem:[#allocation5 + $0x88] sm:$0xff]
        %v409 = vld [vmem:[#allocation5 + $0x90] sm:$0xff]
        %v410 = vld [vmem:[#allocation5 + $0x98] sm:$0xff]
        %v411 = vld [vmem:[#allocation5 + $0xa0] sm:$0xff]
        %v412 = vld [vmem:[#allocation5 + $0xa8] sm:$0xff]
        %v413 = vld [vmem:[#allocation5 + $0xb0] sm:$0xff]
        %v414 = vld [vmem:[#allocation5 + $0xb8] sm:$0xff]
        %v415 = vld [vmem:[#allocation5 + $0xc0] sm:$0xff]
        %v416 = vld [vmem:[#allocation5 + $0xc8] sm:$0xff]
        %v417 = vld [vmem:[#allocation5 + $0xd0] sm:$0xff]
        %v418 = vld [vmem:[#allocation5 + $0xd8] sm:$0xff]
        %v419 = vld [vmem:[#allocation5 + $0xe0] sm:$0xff]
        %v420 = vld [vmem:[#allocation5 + $0xe8] sm:$0xff]
        %v421 = vld [vmem:[#allocation5 + $0xf0] sm:$0xff]
        %v422 = vld [vmem:[#allocation5 + $0xf8] sm:$0xff]
        %v423 = vld [vmem:[#allocation5 + $0x100] sm:$0xff]
        %v424 = vld [vmem:[#allocation5 + $0x108] sm:$0xff]
        %v425 = vld [vmem:[#allocation5 + $0x110] sm:$0xff]
        %v426 = vld [vmem:[#allocation5 + $0x118] sm:$0xff]
        %v427 = vld [vmem:[#allocation5 + $0x120] sm:$0xff]
        %v428 = vld [vmem:[#allocation5 + $0x128] sm:$0xff]
        %v429 = vld [vmem:[#allocation5 + $0x130] sm:$0xff]
        %v430 = vld [vmem:[#allocation5 + $0x138] sm:$0xff]
        %v431 = vld [vmem:[#allocation5 + $0x140] sm:$0xff]
        %v432 = vld [vmem:[#allocation5 + $0x148] sm:$0xff]
        %v433 = vld [vmem:[#allocation5 + $0x150] sm:$0xff]
        %v434 = vld [vmem:[#allocation5 + $0x158] sm:$0xff]
        %v435 = vld [vmem:[#allocation5 + $0x160] sm:$0xff]
        %v436 = vld [vmem:[#allocation5 + $0x168] sm:$0xff]
        %v437 = vld [vmem:[#allocation5 + $0x170] sm:$0xff]
        %v438 = vld [vmem:[#allocation5 + $0x178] sm:$0xff]
        %v439 = vld [vmem:[#allocation5 + $0x180] sm:$0xff]
        %v440 = vld [vmem:[#allocation5 + $0x188] sm:$0xff]
        %v441 = vld [vmem:[#allocation5 + $0x190] sm:$0xff]
        %v442 = vld [vmem:[#allocation5 + $0x198] sm:$0xff]
        %v443 = vld [vmem:[#allocation5 + $0x1a0] sm:$0xff]
        %v444 = vld [vmem:[#allocation5 + $0x1a8] sm:$0xff]
        %v445 = vld [vmem:[#allocation5 + $0x1b0] sm:$0xff]
        %v446 = vld [vmem:[#allocation5 + $0x1b8] sm:$0xff]
        %v447 = vld [vmem:[#allocation5 + $0x1c0] sm:$0xff]
        %v448 = vld [vmem:[#allocation5 + $0x1c8] sm:$0xff]
        %v449 = vld [vmem:[#allocation5 + $0x1d0] sm:$0xff]
        %v450 = vld [vmem:[#allocation5 + $0x1d8] sm:$0xff]
        %v451 = vld [vmem:[#allocation5 + $0x1e0] sm:$0xff]
        %v452 = vld [vmem:[#allocation5 + $0x1e8] sm:$0xff]
        %v453 = vld [vmem:[#allocation5 + $0x1f0] sm:$0xff]
        %v454 = vld [vmem:[#allocation5 + $0x1f8] sm:$0xff]
        %v455 = vld [vmem:[#allocation5 + $0x200] sm:$0xff]
        %v456 = vld [vmem:[#allocation5 + $0x208] sm:$0xff]
        %v457 = vld [vmem:[#allocation5 + $0x210] sm:$0xff]
        %v458 = vld [vmem:[#allocation5 + $0x218] sm:$0xff]
        %v459 = vld [vmem:[#allocation5 + $0x220] sm:$0xff]
        %v460 = vld [vmem:[#allocation5 + $0x228] sm:$0xff]
        %v461 = vld [vmem:[#allocation5 + $0x230] sm:$0xff]
        %v462 = vld [vmem:[#allocation5 + $0x238] sm:$0xff]
        %v463 = vld [vmem:[#allocation5 + $0x240] sm:$0xff]
        %v464 = vld [vmem:[#allocation5 + $0x248] sm:$0xff]
        %v465 = vld [vmem:[#allocation5 + $0x250] sm:$0xff]
        %v466 = vld [vmem:[#allocation5 + $0x258] sm:$0xff]
        %v467 = vld [vmem:[#allocation5 + $0x260] sm:$0xff]
        %v468 = vld [vmem:[#allocation5 + $0x268] sm:$0xff]
        %v469 = vld [vmem:[#allocation5 + $0x270] sm:$0xff]
        %v470 = vld [vmem:[#allocation5 + $0x278] sm:$0xff]
        %v471 = vld [vmem:[#allocation5 + $0x280] sm:$0xff]
        %v472 = vld [vmem:[#allocation5 + $0x288] sm:$0xff]
        %v473 = vld [vmem:[#allocation5 + $0x290] sm:$0xff]
        %v474 = vld [vmem:[#allocation5 + $0x298] sm:$0xff]
        %v475 = vld [vmem:[#allocation5 + $0x2a0] sm:$0xff]
        %v476 = vld [vmem:[#allocation5 + $0x2a8] sm:$0xff]
        %v477 = vld [vmem:[#allocation5 + $0x2b0] sm:$0xff]
        %v478 = vld [vmem:[#allocation5 + $0x2b8] sm:$0xff]
        %v479 = vld [vmem:[#allocation5 + $0x2c0] sm:$0xff]
        %v480 = vld [vmem:[#allocation5 + $0x2c8] sm:$0xff]
        %v481 = vld [vmem:[#allocation5 + $0x2d0] sm:$0xff]
        %v482 = vld [vmem:[#allocation5 + $0x2d8] sm:$0xff]
        %v483 = vld [vmem:[#allocation5 + $0x2e0] sm:$0xff]
        %v484 = vld [vmem:[#allocation5 + $0x2e8] sm:$0xff]
        %v485 = vld [vmem:[#allocation5 + $0x2f0] sm:$0xff]
        %v486 = vld [vmem:[#allocation5 + $0x2f8] sm:$0xff]
        %v583 = vunpack.c.l.b16 %v391
        %v584 = vunpack.c.h.b16 %v391
        %v585 = vunpack.c.l.b16 %v392
        %v586 = vunpack.c.h.b16 %v392
        %v587 = vunpack.c.l.b16 %v393
        %v588 = vunpack.c.h.b16 %v393
        %v589 = vunpack.c.l.b16 %v394
        %v590 = vunpack.c.h.b16 %v394
        %v591 = vunpack.c.l.b16 %v395
        %v592 = vunpack.c.h.b16 %v395
        %v593 = vunpack.c.l.b16 %v396
        %v594 = vunpack.c.h.b16 %v396
        %v595 = vunpack.c.l.b16 %v397
        %v596 = vunpack.c.h.b16 %v397
        %v597 = vunpack.c.l.b16 %v398
        %v598 = vunpack.c.h.b16 %v398
        %v599 = vunpack.c.l.b16 %v399
        %v600 = vunpack.c.h.b16 %v399
        %v601 = vunpack.c.l.b16 %v400
        %v602 = vunpack.c.h.b16 %v400
        %v603 = vunpack.c.l.b16 %v401
        %v604 = vunpack.c.h.b16 %v401
        %v605 = vunpack.c.l.b16 %v402
        %v606 = vunpack.c.h.b16 %v402
        %v607 = vunpack.c.l.b16 %v403
        %v608 = vunpack.c.h.b16 %v403
        %v609 = vunpack.c.l.b16 %v404
        %v610 = vunpack.c.h.b16 %v404
        %v611 = vunpack.c.l.b16 %v405
        %v612 = vunpack.c.h.b16 %v405
        %v613 = vunpack.c.l.b16 %v406
        %v614 = vunpack.c.h.b16 %v406
        %v615 = vunpack.c.l.b16 %v407
        %v616 = vunpack.c.h.b16 %v407
        %v617 = vunpack.c.l.b16 %v408
        %v618 = vunpack.c.h.b16 %v408
        %v619 = vunpack.c.l.b16 %v409
        %v620 = vunpack.c.h.b16 %v409
        %v621 = vunpack.c.l.b16 %v410
        %v622 = vunpack.c.h.b16 %v410
        %v623 = vunpack.c.l.b16 %v411
        %v624 = vunpack.c.h.b16 %v411
        %v625 = vunpack.c.l.b16 %v412
        %v626 = vunpack.c.h.b16 %v412
        %v627 = vunpack.c.l.b16 %v413
        %v628 = vunpack.c.h.b16 %v413
        %v629 = vunpack.c.l.b16 %v414
        %v630 = vunpack.c.h.b16 %v414
        %v631 = vunpack.c.l.b16 %v415
        %v632 = vunpack.c.h.b16 %v415
        %v633 = vunpack.c.l.b16 %v416
        %v634 = vunpack.c.h.b16 %v416
        %v635 = vunpack.c.l.b16 %v417
        %v636 = vunpack.c.h.b16 %v417
        %v637 = vunpack.c.l.b16 %v418
        %v638 = vunpack.c.h.b16 %v418
        %v639 = vunpack.c.l.b16 %v419
        %v640 = vunpack.c.h.b16 %v419
        %v641 = vunpack.c.l.b16 %v420
        %v642 = vunpack.c.h.b16 %v420
        %v643 = vunpack.c.l.b16 %v421
        %v644 = vunpack.c.h.b16 %v421
        %v645 = vunpack.c.l.b16 %v422
        %v646 = vunpack.c.h.b16 %v422
        %v647 = vunpack.c.l.b16 %v423
        %v648 = vunpack.c.h.b16 %v423
        %v649 = vunpack.c.l.b16 %v424
        %v650 = vunpack.c.h.b16 %v424
        %v651 = vunpack.c.l.b16 %v425
        %v652 = vunpack.c.h.b16 %v425
        %v653 = vunpack.c.l.b16 %v426
        %v654 = vunpack.c.h.b16 %v426
        %v655 = vunpack.c.l.b16 %v427
        %v656 = vunpack.c.h.b16 %v427
        %v657 = vunpack.c.l.b16 %v428
        %v658 = vunpack.c.h.b16 %v428
        %v659 = vunpack.c.l.b16 %v429
        %v660 = vunpack.c.h.b16 %v429
        %v661 = vunpack.c.l.b16 %v430
        %v662 = vunpack.c.h.b16 %v430
        %v663 = vunpack.c.l.b16 %v431
        %v664 = vunpack.c.h.b16 %v431
        %v665 = vunpack.c.l.b16 %v432
        %v666 = vunpack.c.h.b16 %v432
        %v667 = vunpack.c.l.b16 %v433
        %v668 = vunpack.c.h.b16 %v433
        %v669 = vunpack.c.l.b16 %v434
        %v670 = vunpack.c.h.b16 %v434
        %v671 = vunpack.c.l.b16 %v435
        %v672 = vunpack.c.h.b16 %v435
        %v673 = vunpack.c.l.b16 %v436
        %v674 = vunpack.c.h.b16 %v436
        %v675 = vunpack.c.l.b16 %v437
        %v676 = vunpack.c.h.b16 %v437
        %v677 = vunpack.c.l.b16 %v438
        %v678 = vunpack.c.h.b16 %v438
        %v679 = vunpack.c.l.b16 %v439
        %v680 = vunpack.c.h.b16 %v439
        %v681 = vunpack.c.l.b16 %v440
        %v682 = vunpack.c.h.b16 %v440
        %v683 = vunpack.c.l.b16 %v441
        %v684 = vunpack.c.h.b16 %v441
        %v685 = vunpack.c.l.b16 %v442
        %v686 = vunpack.c.h.b16 %v442
        %v687 = vunpack.c.l.b16 %v443
        %v688 = vunpack.c.h.b16 %v443
        %v689 = vunpack.c.l.b16 %v444
        %v690 = vunpack.c.h.b16 %v444
        %v691 = vunpack.c.l.b16 %v445
        %v692 = vunpack.c.h.b16 %v445
        %v693 = vunpack.c.l.b16 %v446
        %v694 = vunpack.c.h.b16 %v446
        %v695 = vunpack.c.l.b16 %v447
        %v696 = vunpack.c.h.b16 %v447
        %v697 = vunpack.c.l.b16 %v448
        %v698 = vunpack.c.h.b16 %v448
        %v699 = vunpack.c.l.b16 %v449
        %v700 = vunpack.c.h.b16 %v449
        %v701 = vunpack.c.l.b16 %v450
        %v702 = vunpack.c.h.b16 %v450
        %v703 = vunpack.c.l.b16 %v451
        %v704 = vunpack.c.h.b16 %v451
        %v705 = vunpack.c.l.b16 %v452
        %v706 = vunpack.c.h.b16 %v452
        %v707 = vunpack.c.l.b16 %v453
        %v708 = vunpack.c.h.b16 %v453
        %v709 = vunpack.c.l.b16 %v454
        %v710 = vunpack.c.h.b16 %v454
        %v711 = vunpack.c.l.b16 %v455
        %v712 = vunpack.c.h.b16 %v455
        %v713 = vunpack.c.l.b16 %v456
        %v714 = vunpack.c.h.b16 %v456
        %v715 = vunpack.c.l.b16 %v457
        %v716 = vunpack.c.h.b16 %v457
        %v717 = vunpack.c.l.b16 %v458
        %v718 = vunpack.c.h.b16 %v458
        %v719 = vunpack.c.l.b16 %v459
        %v720 = vunpack.c.h.b16 %v459
        %v721 = vunpack.c.l.b16 %v460
        %v722 = vunpack.c.h.b16 %v460
        %v723 = vunpack.c.l.b16 %v461
        %v724 = vunpack.c.h.b16 %v461
        %v725 = vunpack.c.l.b16 %v462
        %v726 = vunpack.c.h.b16 %v462
        %v727 = vunpack.c.l.b16 %v463
        %v728 = vunpack.c.h.b16 %v463
        %v729 = vunpack.c.l.b16 %v464
        %v730 = vunpack.c.h.b16 %v464
        %v731 = vunpack.c.l.b16 %v465
        %v732 = vunpack.c.h.b16 %v465
        %v733 = vunpack.c.l.b16 %v466
        %v734 = vunpack.c.h.b16 %v466
        %v735 = vunpack.c.l.b16 %v467
        %v736 = vunpack.c.h.b16 %v467
        %v737 = vunpack.c.l.b16 %v468
        %v738 = vunpack.c.h.b16 %v468
        %v739 = vunpack.c.l.b16 %v469
        %v740 = vunpack.c.h.b16 %v469
        %v741 = vunpack.c.l.b16 %v470
        %v742 = vunpack.c.h.b16 %v470
        %v743 = vunpack.c.l.b16 %v471
        %v744 = vunpack.c.h.b16 %v471
        %v745 = vunpack.c.l.b16 %v472
        %v746 = vunpack.c.h.b16 %v472
        %v747 = vunpack.c.l.b16 %v473
        %v748 = vunpack.c.h.b16 %v473
        %v749 = vunpack.c.l.b16 %v474
        %v750 = vunpack.c.h.b16 %v474
        %v751 = vunpack.c.l.b16 %v475
        %v752 = vunpack.c.h.b16 %v475
        %v753 = vunpack.c.l.b16 %v476
        %v754 = vunpack.c.h.b16 %v476
        %v755 = vunpack.c.l.b16 %v477
        %v756 = vunpack.c.h.b16 %v477
        %v757 = vunpack.c.l.b16 %v478
        %v758 = vunpack.c.h.b16 %v478
        %v759 = vunpack.c.l.b16 %v479
        %v760 = vunpack.c.h.b16 %v479
        %v761 = vunpack.c.l.b16 %v480
        %v762 = vunpack.c.h.b16 %v480
        %v763 = vunpack.c.l.b16 %v481
        %v764 = vunpack.c.h.b16 %v481
        %v765 = vunpack.c.l.b16 %v482
        %v766 = vunpack.c.h.b16 %v482
        %v767 = vunpack.c.l.b16 %v483
        %v768 = vunpack.c.h.b16 %v483
        %v769 = vunpack.c.l.b16 %v484
        %v770 = vunpack.c.h.b16 %v484
        %v771 = vunpack.c.l.b16 %v485
        %v772 = vunpack.c.h.b16 %v485
        %v773 = vunpack.c.l.b16 %v486
        %v774 = vunpack.c.h.b16 %v486
        %v775 = vpack.c.b16 %v585, %v583
        %v776 = vpack.c.b16 %v586, %v584
        %v777 = vpack.c.b16 %v589, %v587
        %v778 = vpack.c.b16 %v590, %v588
        %v779 = vpack.c.b16 %v593, %v591
        %v780 = vpack.c.b16 %v594, %v592
        %v781 = vpack.c.b16 %v597, %v595
        %v782 = vpack.c.b16 %v598, %v596
        %v783 = vpack.c.b16 %v601, %v599
        %v784 = vpack.c.b16 %v602, %v600
        %v785 = vpack.c.b16 %v605, %v603
        %v786 = vpack.c.b16 %v606, %v604
        %v787 = vpack.c.b16 %v609, %v607
        %v788 = vpack.c.b16 %v610, %v608
        %v789 = vpack.c.b16 %v613, %v611
        %v790 = vpack.c.b16 %v614, %v612
        %v791 = vpack.c.b16 %v617, %v615
        %v792 = vpack.c.b16 %v618, %v616
        %v793 = vpack.c.b16 %v621, %v619
        %v794 = vpack.c.b16 %v622, %v620
        %v795 = vpack.c.b16 %v625, %v623
        %v796 = vpack.c.b16 %v626, %v624
        %v797 = vpack.c.b16 %v629, %v627
        %v798 = vpack.c.b16 %v630, %v628
        %v799 = vpack.c.b16 %v633, %v631
        %v800 = vpack.c.b16 %v634, %v632
        %v801 = vpack.c.b16 %v637, %v635
        %v802 = vpack.c.b16 %v638, %v636
        %v803 = vpack.c.b16 %v641, %v639
        %v804 = vpack.c.b16 %v642, %v640
        %v805 = vpack.c.b16 %v645, %v643
        %v806 = vpack.c.b16 %v646, %v644
        %v807 = vpack.c.b16 %v649, %v647
        %v808 = vpack.c.b16 %v650, %v648
        %v809 = vpack.c.b16 %v653, %v651
        %v810 = vpack.c.b16 %v654, %v652
        %v811 = vpack.c.b16 %v657, %v655
        %v812 = vpack.c.b16 %v658, %v656
        %v813 = vpack.c.b16 %v661, %v659
        %v814 = vpack.c.b16 %v662, %v660
        %v815 = vpack.c.b16 %v665, %v663
        %v816 = vpack.c.b16 %v666, %v664
        %v817 = vpack.c.b16 %v669, %v667
        %v818 = vpack.c.b16 %v670, %v668
        %v819 = vpack.c.b16 %v673, %v671
        %v820 = vpack.c.b16 %v674, %v672
        %v821 = vpack.c.b16 %v677, %v675
        %v822 = vpack.c.b16 %v678, %v676
        %v823 = vpack.c.b16 %v681, %v679
        %v824 = vpack.c.b16 %v682, %v680
        %v825 = vpack.c.b16 %v685, %v683
        %v826 = vpack.c.b16 %v686, %v684
        %v827 = vpack.c.b16 %v689, %v687
        %v828 = vpack.c.b16 %v690, %v688
        %v829 = vpack.c.b16 %v693, %v691
        %v830 = vpack.c.b16 %v694, %v692
        %v831 = vpack.c.b16 %v697, %v695
        %v832 = vpack.c.b16 %v698, %v696
        %v833 = vpack.c.b16 %v701, %v699
        %v834 = vpack.c.b16 %v702, %v700
        %v835 = vpack.c.b16 %v705, %v703
        %v836 = vpack.c.b16 %v706, %v704
        %v837 = vpack.c.b16 %v709, %v707
        %v838 = vpack.c.b16 %v710, %v708
        %v839 = vpack.c.b16 %v713, %v711
        %v840 = vpack.c.b16 %v714, %v712
        %v841 = vpack.c.b16 %v717, %v715
        %v842 = vpack.c.b16 %v718, %v716
        %v843 = vpack.c.b16 %v721, %v719
        %v844 = vpack.c.b16 %v722, %v720
        %v845 = vpack.c.b16 %v725, %v723
        %v846 = vpack.c.b16 %v726, %v724
        %v847 = vpack.c.b16 %v729, %v727
        %v848 = vpack.c.b16 %v730, %v728
        %v849 = vpack.c.b16 %v733, %v731
        %v850 = vpack.c.b16 %v734, %v732
        %v851 = vpack.c.b16 %v737, %v735
        %v852 = vpack.c.b16 %v738, %v736
        %v853 = vpack.c.b16 %v741, %v739
        %v854 = vpack.c.b16 %v742, %v740
        %v855 = vpack.c.b16 %v745, %v743
        %v856 = vpack.c.b16 %v746, %v744
        %v857 = vpack.c.b16 %v749, %v747
        %v858 = vpack.c.b16 %v750, %v748
        %v859 = vpack.c.b16 %v753, %v751
        %v860 = vpack.c.b16 %v754, %v752
        %v861 = vpack.c.b16 %v757, %v755
        %v862 = vpack.c.b16 %v758, %v756
        %v863 = vpack.c.b16 %v761, %v759
        %v864 = vpack.c.b16 %v762, %v760
        %v865 = vpack.c.b16 %v765, %v763
        %v866 = vpack.c.b16 %v766, %v764
        %v867 = vpack.c.b16 %v769, %v767
        %v868 = vpack.c.b16 %v770, %v768
        %v869 = vpack.c.b16 %v773, %v771
        %v870 = vpack.c.b16 %v774, %v772
        %967 = vmatprep.subr.bf16.mxu0 %v790
        %968 = vmatpush1.bf16.msra.mxu0 %v789
        %969 = vmatprep.subr.bf16.mxu0 %v788
        %970 = vmatpush1.bf16.msra.mxu0 %v787
        %971 = vmatprep.subr.bf16.mxu0 %v786
        %972 = vmatpush1.bf16.msra.mxu0 %v785
        %973 = vmatprep.subr.bf16.mxu0 %v784
        %974 = vmatpush1.bf16.msra.mxu0 %v783
        %975 = vmatprep.subr.bf16.mxu0 %v782
        %976 = vmatpush1.bf16.msra.mxu0 %v781
        %977 = vmatprep.subr.bf16.mxu0 %v780
        %978 = vmatpush1.bf16.msra.mxu0 %v779
        %979 = vmatprep.subr.bf16.mxu0 %v778
        %980 = vmatpush1.bf16.msra.mxu0 %v777
        %981 = vmatprep.subr.bf16.mxu0 %v776
        %982 = vmatpush1.bf16.msra.mxu0 %v775
        %983 = vmatprep.subr.bf16.mxu0 %v806
        %984 = vmatpush2.bf16.msra.mxu0 %v805
        %985 = vmatprep.subr.bf16.mxu0 %v804
        %986 = vmatpush2.bf16.msra.mxu0 %v803
        %987 = vmatprep.subr.bf16.mxu0 %v802
        %988 = vmatpush2.bf16.msra.mxu0 %v801
        %989 = vmatprep.subr.bf16.mxu0 %v800
        %990 = vmatpush2.bf16.msra.mxu0 %v799
        %991 = vmatprep.subr.bf16.mxu0 %v798
        %992 = vmatpush2.bf16.msra.mxu0 %v797
        %993 = vmatprep.subr.bf16.mxu0 %v796
        %994 = vmatpush2.bf16.msra.mxu0 %v795
        %995 = vmatprep.subr.bf16.mxu0 %v794
        %996 = vmatpush2.bf16.msra.mxu0 %v793
        %997 = vmatprep.subr.bf16.mxu0 %v792
        %998 = vmatpush2.bf16.msra.mxu0 %v791
        %999 = vmatprep.mubr.bf16.mxu0 %v386
        %1000 = vmatmul.mubr.bf16.gmra.mxu0 %v385
        %v1001 = vpop.f32.mrf.mxu0
        %v1002 = vadd.f32 0.0, %v1001
        %v1003 = vpop.f32.mrf.mxu0
        %v1004 = vadd.f32 0.0, %v1003
        %v1005 = vpop.f32.mrf.mxu0
        %v1006 = vadd.f32 0.0, %v1005
        %v1007 = vpop.f32.mrf.mxu0
        %v1008 = vadd.f32 0.0, %v1007
        %1009 = vdwg.mxu0
        %1010 = vmatprep.subr.bf16.mxu0 %v822
        %1011 = vmatpush1.bf16.msra.mxu0 %v821
        %1012 = vmatprep.subr.bf16.mxu0 %v820
        %1013 = vmatpush1.bf16.msra.mxu0 %v819
        %1014 = vmatprep.subr.bf16.mxu0 %v818
        %1015 = vmatpush1.bf16.msra.mxu0 %v817
        %1016 = vmatprep.subr.bf16.mxu0 %v816
        %1017 = vmatpush1.bf16.msra.mxu0 %v815
        %1018 = vmatprep.subr.bf16.mxu0 %v814
        %1019 = vmatpush1.bf16.msra.mxu0 %v813
        %1020 = vmatprep.subr.bf16.mxu0 %v812
        %1021 = vmatpush1.bf16.msra.mxu0 %v811
        %1022 = vmatprep.subr.bf16.mxu0 %v810
        %1023 = vmatpush1.bf16.msra.mxu0 %v809
        %1024 = vmatprep.subr.bf16.mxu0 %v808
        %1025 = vmatpush1.bf16.msra.mxu0 %v807
        %1026 = vmatprep.subr.bf16.mxu0 %v838
        %1027 = vmatpush2.bf16.msra.mxu0 %v837
        %1028 = vmatprep.subr.bf16.mxu0 %v836
        %1029 = vmatpush2.bf16.msra.mxu0 %v835
        %1030 = vmatprep.subr.bf16.mxu0 %v834
        %1031 = vmatpush2.bf16.msra.mxu0 %v833
        %1032 = vmatprep.subr.bf16.mxu0 %v832
        %1033 = vmatpush2.bf16.msra.mxu0 %v831
        %1034 = vmatprep.subr.bf16.mxu0 %v830
        %1035 = vmatpush2.bf16.msra.mxu0 %v829
        %1036 = vmatprep.subr.bf16.mxu0 %v828
        %1037 = vmatpush2.bf16.msra.mxu0 %v827
        %1038 = vmatprep.subr.bf16.mxu0 %v826
        %1039 = vmatpush2.bf16.msra.mxu0 %v825
        %1040 = vmatprep.subr.bf16.mxu0 %v824
        %1041 = vmatpush2.bf16.msra.mxu0 %v823
        %1042 = vmatprep.mubr.bf16.mxu0 %v388
        %1043 = vmatmul.mubr.bf16.gmra.mxu0 %v387
        %v1044 = vpop.f32.mrf.mxu0
        %v1045 = vadd.f32 %v1002, %v1044
        %v1046 = vpop.f32.mrf.mxu0
        %v1047 = vadd.f32 %v1004, %v1046
        %v1048 = vpop.f32.mrf.mxu0
        %v1049 = vadd.f32 %v1006, %v1048
        %v1050 = vpop.f32.mrf.mxu0
        %v1051 = vadd.f32 %v1008, %v1050
        %1052 = vdwg.mxu0
        %1053 = vmatprep.subr.bf16.mxu0 %v854
        %1054 = vmatpush1.bf16.msra.mxu0 %v853
        %1055 = vmatprep.subr.bf16.mxu0 %v852
        %1056 = vmatpush1.bf16.msra.mxu0 %v851
        %1057 = vmatprep.subr.bf16.mxu0 %v850
        %1058 = vmatpush1.bf16.msra.mxu0 %v849
        %1059 = vmatprep.subr.bf16.mxu0 %v848
        %1060 = vmatpush1.bf16.msra.mxu0 %v847
        %1061 = vmatprep.subr.bf16.mxu0 %v846
        %1062 = vmatpush1.bf16.msra.mxu0 %v845
        %1063 = vmatprep.subr.bf16.mxu0 %v844
        %1064 = vmatpush1.bf16.msra.mxu0 %v843
        %1065 = vmatprep.subr.bf16.mxu0 %v842
        %1066 = vmatpush1.bf16.msra.mxu0 %v841
        %1067 = vmatprep.subr.bf16.mxu0 %v840
        %1068 = vmatpush1.bf16.msra.mxu0 %v839
        %1069 = vmatprep.subr.bf16.mxu0 %v870
        %1070 = vmatpush2.bf16.msra.mxu0 %v869
        %1071 = vmatprep.subr.bf16.mxu0 %v868
        %1072 = vmatpush2.bf16.msra.mxu0 %v867
        %1073 = vmatprep.subr.bf16.mxu0 %v866
        %1074 = vmatpush2.bf16.msra.mxu0 %v865
        %1075 = vmatprep.subr.bf16.mxu0 %v864
        %1076 = vmatpush2.bf16.msra.mxu0 %v863
        %1077 = vmatprep.subr.bf16.mxu0 %v862
        %1078 = vmatpush2.bf16.msra.mxu0 %v861
        %1079 = vmatprep.subr.bf16.mxu0 %v860
        %1080 = vmatpush2.bf16.msra.mxu0 %v859
        %1081 = vmatprep.subr.bf16.mxu0 %v858
        %1082 = vmatpush2.bf16.msra.mxu0 %v857
        %1083 = vmatprep.subr.bf16.mxu0 %v856
        %1084 = vmatpush2.bf16.msra.mxu0 %v855
        %1085 = vmatprep.mubr.bf16.mxu0 %v390
        %1086 = vmatmul.mubr.bf16.gmra.mxu0 %v389
        %v1087 = vpop.f32.mrf.mxu0
        %v1088 = vadd.f32 %v1045, %v1087
        %v1089 = vpop.f32.mrf.mxu0
        %v1090 = vadd.f32 %v1047, %v1089
        %v1091 = vpop.f32.mrf.mxu0
        %v1092 = vadd.f32 %v1049, %v1091
        %v1093 = vpop.f32.mrf.mxu0
        %v1094 = vadd.f32 %v1051, %v1093
        %1095 = vdwg.mxu0
        %v1096 = vld [vmem:[%s3] sm:$0x3]
        %v1098 = vlaneseq
        %v1099 = vshrl.u32 %v1098, 7
        %v1100 = vsub.s32 0, %v1099
        %v1101 = vrot.slane %v1096, %v1100
        %v1102 = vlaneseq
        %v1103 = vshrl.u32 %v1102, 7
        %v1104 = vsub.s32 1, %v1103
        %v1105 = vrot.slane %v1096, %v1104
        %v1108 = vmul.f32 %v1088, %v1101
        %v1109 = vmul.f32 %v1090, %v1105
        %v1110 = vmul.f32 %v1092, %v1101
        %v1111 = vmul.f32 %v1094, %v1105
        %v1112 = vld [vmem:[%s4] sm:$0x3]
        %v1114 = vlaneseq
        %v1115 = vshrl.u32 %v1114, 7
        %v1116 = vsub.s32 0, %v1115
        %v1117 = vrot.slane %v1112, %v1116
        %v1118 = vlaneseq
        %v1119 = vshrl.u32 %v1118, 7
        %v1120 = vsub.s32 1, %v1119
        %v1121 = vrot.slane %v1112, %v1120
        %v1124 = vadd.f32 %v1108, %v1117
        %v1125 = vadd.f32 %v1109, %v1121
        %v1126 = vadd.f32 %v1110, %v1117
        %v1127 = vadd.f32 %v1111, %v1121
        %v1128 = vmax.f32 %v1124, 0.0
        %v1129 = vmax.f32 %v1125, 0.0
        %v1130 = vmax.f32 %v1126, 0.0
        %v1131 = vmax.f32 %v1127, 0.0
        %v1136 = vrot.slane %v1128, 7
        %v1137 = vrot.slane %v1129, 7
        %v1138 = vrot.slane %v1130, 7
        %v1139 = vsel %vm334, %v1136, %v1138
        %v1140 = vrot.slane %v1131, 7
        %v1141 = vsel %vm334, %v1137, %v1140
        %v1148 = vsel %vm334, 0.0, %v1136
        %v1149 = vsel %vm334, 0.0, %v1137
        %v1150 = vsel %vm334, %v1138, 0.0
        %v1151 = vsel %vm334, %v1140, 0.0
        %v1156 = vrot.slane %v1148, 1
        %v1157 = vrot.slane %v1139, 1
        %v1158 = vsel %vm355, %v1156, %v1157
        %v1159 = vrot.slane %v1149, 1
        %v1160 = vrot.slane %v1141, 1
        %v1161 = vsel %vm355, %v1159, %v1160
        %v1162 = vrot.slane %v1150, 1
        %v1163 = vsel %vm355, %v1157, %v1162
        %v1164 = vrot.slane %v1151, 1
        %v1165 = vsel %vm355, %v1160, %v1164
        %v1170 = vrot.slane %v1148, 2
        %v1171 = vrot.slane %v1139, 2
        %v1172 = vsel %vm370, %v1170, %v1171
        %v1173 = vrot.slane %v1149, 2
        %v1174 = vrot.slane %v1141, 2
        %v1175 = vsel %vm370, %v1173, %v1174
        %v1176 = vrot.slane %v1150, 2
        %v1177 = vsel %vm370, %v1171, %v1176
        %v1178 = vrot.slane %v1151, 2
        %v1179 = vsel %vm370, %v1174, %v1178
        %v1184 = vpack.c.bf16 %v1139, %v1148
        %v1185 = vpack.c.bf16 %v1141, %v1149
        %v1186 = vpack.c.bf16 %v1163, %v1158
        %v1187 = vpack.c.bf16 %v1165, %v1161
        %v1188 = vpack.c.bf16 %v1177, %v1172
        %v1189 = vpack.c.bf16 %v1179, %v1175
        %v1190 = vld [vmem:[#allocation7] sm:$0xff]
        %v1191 = vld [vmem:[#allocation7 + $0x8] sm:$0xff]
        %v1192 = vld [vmem:[#allocation7 + $0x10] sm:$0xff]
        %v1193 = vld [vmem:[#allocation7 + $0x18] sm:$0xff]
        %v1194 = vld [vmem:[#allocation7 + $0x20] sm:$0xff]
        %v1195 = vld [vmem:[#allocation7 + $0x28] sm:$0xff]
        %v1196 = vld [vmem:[#allocation7 + $0x30] sm:$0xff]
        %v1197 = vld [vmem:[#allocation7 + $0x38] sm:$0xff]
        %v1198 = vld [vmem:[#allocation7 + $0x40] sm:$0xff]
        %v1199 = vld [vmem:[#allocation7 + $0x48] sm:$0xff]
        %v1200 = vld [vmem:[#allocation7 + $0x50] sm:$0xff]
        %v1201 = vld [vmem:[#allocation7 + $0x58] sm:$0xff]
        %v1202 = vld [vmem:[#allocation7 + $0x60] sm:$0xff]
        %v1203 = vld [vmem:[#allocation7 + $0x68] sm:$0xff]
        %v1204 = vld [vmem:[#allocation7 + $0x70] sm:$0xff]
        %v1205 = vld [vmem:[#allocation7 + $0x78] sm:$0xff]
        %v1206 = vld [vmem:[#allocation7 + $0x80] sm:$0xff]
        %v1207 = vld [vmem:[#allocation7 + $0x88] sm:$0xff]
        %v1208 = vld [vmem:[#allocation7 + $0x90] sm:$0xff]
        %v1209 = vld [vmem:[#allocation7 + $0x98] sm:$0xff]
        %v1210 = vld [vmem:[#allocation7 + $0xa0] sm:$0xff]
        %v1211 = vld [vmem:[#allocation7 + $0xa8] sm:$0xff]
        %v1212 = vld [vmem:[#allocation7 + $0xb0] sm:$0xff]
        %v1213 = vld [vmem:[#allocation7 + $0xb8] sm:$0xff]
        %v1214 = vld [vmem:[#allocation7 + $0xc0] sm:$0xff]
        %v1215 = vld [vmem:[#allocation7 + $0xc8] sm:$0xff]
        %v1216 = vld [vmem:[#allocation7 + $0xd0] sm:$0xff]
        %v1217 = vld [vmem:[#allocation7 + $0xd8] sm:$0xff]
        %v1218 = vld [vmem:[#allocation7 + $0xe0] sm:$0xff]
        %v1219 = vld [vmem:[#allocation7 + $0xe8] sm:$0xff]
        %v1220 = vld [vmem:[#allocation7 + $0xf0] sm:$0xff]
        %v1221 = vld [vmem:[#allocation7 + $0xf8] sm:$0xff]
        %v1222 = vld [vmem:[#allocation7 + $0x100] sm:$0xff]
        %v1223 = vld [vmem:[#allocation7 + $0x108] sm:$0xff]
        %v1224 = vld [vmem:[#allocation7 + $0x110] sm:$0xff]
        %v1225 = vld [vmem:[#allocation7 + $0x118] sm:$0xff]
        %v1226 = vld [vmem:[#allocation7 + $0x120] sm:$0xff]
        %v1227 = vld [vmem:[#allocation7 + $0x128] sm:$0xff]
        %v1228 = vld [vmem:[#allocation7 + $0x130] sm:$0xff]
        %v1229 = vld [vmem:[#allocation7 + $0x138] sm:$0xff]
        %v1230 = vld [vmem:[#allocation7 + $0x140] sm:$0xff]
        %v1231 = vld [vmem:[#allocation7 + $0x148] sm:$0xff]
        %v1232 = vld [vmem:[#allocation7 + $0x150] sm:$0xff]
        %v1233 = vld [vmem:[#allocation7 + $0x158] sm:$0xff]
        %v1234 = vld [vmem:[#allocation7 + $0x160] sm:$0xff]
        %v1235 = vld [vmem:[#allocation7 + $0x168] sm:$0xff]
        %v1236 = vld [vmem:[#allocation7 + $0x170] sm:$0xff]
        %v1237 = vld [vmem:[#allocation7 + $0x178] sm:$0xff]
        %v1238 = vld [vmem:[#allocation7 + $0x180] sm:$0xff]
        %v1239 = vld [vmem:[#allocation7 + $0x188] sm:$0xff]
        %v1240 = vld [vmem:[#allocation7 + $0x190] sm:$0xff]
        %v1241 = vld [vmem:[#allocation7 + $0x198] sm:$0xff]
        %v1242 = vld [vmem:[#allocation7 + $0x1a0] sm:$0xff]
        %v1243 = vld [vmem:[#allocation7 + $0x1a8] sm:$0xff]
        %v1244 = vld [vmem:[#allocation7 + $0x1b0] sm:$0xff]
        %v1245 = vld [vmem:[#allocation7 + $0x1b8] sm:$0xff]
        %v1246 = vld [vmem:[#allocation7 + $0x1c0] sm:$0xff]
        %v1247 = vld [vmem:[#allocation7 + $0x1c8] sm:$0xff]
        %v1248 = vld [vmem:[#allocation7 + $0x1d0] sm:$0xff]
        %v1249 = vld [vmem:[#allocation7 + $0x1d8] sm:$0xff]
        %v1250 = vld [vmem:[#allocation7 + $0x1e0] sm:$0xff]
        %v1251 = vld [vmem:[#allocation7 + $0x1e8] sm:$0xff]
        %v1252 = vld [vmem:[#allocation7 + $0x1f0] sm:$0xff]
        %v1253 = vld [vmem:[#allocation7 + $0x1f8] sm:$0xff]
        %v1254 = vld [vmem:[#allocation7 + $0x200] sm:$0xff]
        %v1255 = vld [vmem:[#allocation7 + $0x208] sm:$0xff]
        %v1256 = vld [vmem:[#allocation7 + $0x210] sm:$0xff]
        %v1257 = vld [vmem:[#allocation7 + $0x218] sm:$0xff]
        %v1258 = vld [vmem:[#allocation7 + $0x220] sm:$0xff]
        %v1259 = vld [vmem:[#allocation7 + $0x228] sm:$0xff]
        %v1260 = vld [vmem:[#allocation7 + $0x230] sm:$0xff]
        %v1261 = vld [vmem:[#allocation7 + $0x238] sm:$0xff]
        %v1262 = vld [vmem:[#allocation7 + $0x240] sm:$0xff]
        %v1263 = vld [vmem:[#allocation7 + $0x248] sm:$0xff]
        %v1264 = vld [vmem:[#allocation7 + $0x250] sm:$0xff]
        %v1265 = vld [vmem:[#allocation7 + $0x258] sm:$0xff]
        %v1266 = vld [vmem:[#allocation7 + $0x260] sm:$0xff]
        %v1267 = vld [vmem:[#allocation7 + $0x268] sm:$0xff]
        %v1268 = vld [vmem:[#allocation7 + $0x270] sm:$0xff]
        %v1269 = vld [vmem:[#allocation7 + $0x278] sm:$0xff]
        %v1270 = vld [vmem:[#allocation7 + $0x280] sm:$0xff]
        %v1271 = vld [vmem:[#allocation7 + $0x288] sm:$0xff]
        %v1272 = vld [vmem:[#allocation7 + $0x290] sm:$0xff]
        %v1273 = vld [vmem:[#allocation7 + $0x298] sm:$0xff]
        %v1274 = vld [vmem:[#allocation7 + $0x2a0] sm:$0xff]
        %v1275 = vld [vmem:[#allocation7 + $0x2a8] sm:$0xff]
        %v1276 = vld [vmem:[#allocation7 + $0x2b0] sm:$0xff]
        %v1277 = vld [vmem:[#allocation7 + $0x2b8] sm:$0xff]
        %v1278 = vld [vmem:[#allocation7 + $0x2c0] sm:$0xff]
        %v1279 = vld [vmem:[#allocation7 + $0x2c8] sm:$0xff]
        %v1280 = vld [vmem:[#allocation7 + $0x2d0] sm:$0xff]
        %v1281 = vld [vmem:[#allocation7 + $0x2d8] sm:$0xff]
        %v1282 = vld [vmem:[#allocation7 + $0x2e0] sm:$0xff]
        %v1283 = vld [vmem:[#allocation7 + $0x2e8] sm:$0xff]
        %v1284 = vld [vmem:[#allocation7 + $0x2f0] sm:$0xff]
        %v1285 = vld [vmem:[#allocation7 + $0x2f8] sm:$0xff]
        %v1382 = vunpack.c.l.b16 %v1190
        %v1383 = vunpack.c.h.b16 %v1190
        %v1384 = vunpack.c.l.b16 %v1191
        %v1385 = vunpack.c.h.b16 %v1191
        %v1386 = vunpack.c.l.b16 %v1192
        %v1387 = vunpack.c.h.b16 %v1192
        %v1388 = vunpack.c.l.b16 %v1193
        %v1389 = vunpack.c.h.b16 %v1193
        %v1390 = vunpack.c.l.b16 %v1194
        %v1391 = vunpack.c.h.b16 %v1194
        %v1392 = vunpack.c.l.b16 %v1195
        %v1393 = vunpack.c.h.b16 %v1195
        %v1394 = vunpack.c.l.b16 %v1196
        %v1395 = vunpack.c.h.b16 %v1196
        %v1396 = vunpack.c.l.b16 %v1197
        %v1397 = vunpack.c.h.b16 %v1197
        %v1398 = vunpack.c.l.b16 %v1198
        %v1399 = vunpack.c.h.b16 %v1198
        %v1400 = vunpack.c.l.b16 %v1199
        %v1401 = vunpack.c.h.b16 %v1199
        %v1402 = vunpack.c.l.b16 %v1200
        %v1403 = vunpack.c.h.b16 %v1200
        %v1404 = vunpack.c.l.b16 %v1201
        %v1405 = vunpack.c.h.b16 %v1201
        %v1406 = vunpack.c.l.b16 %v1202
        %v1407 = vunpack.c.h.b16 %v1202
        %v1408 = vunpack.c.l.b16 %v1203
        %v1409 = vunpack.c.h.b16 %v1203
        %v1410 = vunpack.c.l.b16 %v1204
        %v1411 = vunpack.c.h.b16 %v1204
        %v1412 = vunpack.c.l.b16 %v1205
        %v1413 = vunpack.c.h.b16 %v1205
        %v1414 = vunpack.c.l.b16 %v1206
        %v1415 = vunpack.c.h.b16 %v1206
        %v1416 = vunpack.c.l.b16 %v1207
        %v1417 = vunpack.c.h.b16 %v1207
        %v1418 = vunpack.c.l.b16 %v1208
        %v1419 = vunpack.c.h.b16 %v1208
        %v1420 = vunpack.c.l.b16 %v1209
        %v1421 = vunpack.c.h.b16 %v1209
        %v1422 = vunpack.c.l.b16 %v1210
        %v1423 = vunpack.c.h.b16 %v1210
        %v1424 = vunpack.c.l.b16 %v1211
        %v1425 = vunpack.c.h.b16 %v1211
        %v1426 = vunpack.c.l.b16 %v1212
        %v1427 = vunpack.c.h.b16 %v1212
        %v1428 = vunpack.c.l.b16 %v1213
        %v1429 = vunpack.c.h.b16 %v1213
        %v1430 = vunpack.c.l.b16 %v1214
        %v1431 = vunpack.c.h.b16 %v1214
        %v1432 = vunpack.c.l.b16 %v1215
        %v1433 = vunpack.c.h.b16 %v1215
        %v1434 = vunpack.c.l.b16 %v1216
        %v1435 = vunpack.c.h.b16 %v1216
        %v1436 = vunpack.c.l.b16 %v1217
        %v1437 = vunpack.c.h.b16 %v1217
        %v1438 = vunpack.c.l.b16 %v1218
        %v1439 = vunpack.c.h.b16 %v1218
        %v1440 = vunpack.c.l.b16 %v1219
        %v1441 = vunpack.c.h.b16 %v1219
        %v1442 = vunpack.c.l.b16 %v1220
        %v1443 = vunpack.c.h.b16 %v1220
        %v1444 = vunpack.c.l.b16 %v1221
        %v1445 = vunpack.c.h.b16 %v1221
        %v1446 = vunpack.c.l.b16 %v1222
        %v1447 = vunpack.c.h.b16 %v1222
        %v1448 = vunpack.c.l.b16 %v1223
        %v1449 = vunpack.c.h.b16 %v1223
        %v1450 = vunpack.c.l.b16 %v1224
        %v1451 = vunpack.c.h.b16 %v1224
        %v1452 = vunpack.c.l.b16 %v1225
        %v1453 = vunpack.c.h.b16 %v1225
        %v1454 = vunpack.c.l.b16 %v1226
        %v1455 = vunpack.c.h.b16 %v1226
        %v1456 = vunpack.c.l.b16 %v1227
        %v1457 = vunpack.c.h.b16 %v1227
        %v1458 = vunpack.c.l.b16 %v1228
        %v1459 = vunpack.c.h.b16 %v1228
        %v1460 = vunpack.c.l.b16 %v1229
        %v1461 = vunpack.c.h.b16 %v1229
        %v1462 = vunpack.c.l.b16 %v1230
        %v1463 = vunpack.c.h.b16 %v1230
        %v1464 = vunpack.c.l.b16 %v1231
        %v1465 = vunpack.c.h.b16 %v1231
        %v1466 = vunpack.c.l.b16 %v1232
        %v1467 = vunpack.c.h.b16 %v1232
        %v1468 = vunpack.c.l.b16 %v1233
        %v1469 = vunpack.c.h.b16 %v1233
        %v1470 = vunpack.c.l.b16 %v1234
        %v1471 = vunpack.c.h.b16 %v1234
        %v1472 = vunpack.c.l.b16 %v1235
        %v1473 = vunpack.c.h.b16 %v1235
        %v1474 = vunpack.c.l.b16 %v1236
        %v1475 = vunpack.c.h.b16 %v1236
        %v1476 = vunpack.c.l.b16 %v1237
        %v1477 = vunpack.c.h.b16 %v1237
        %v1478 = vunpack.c.l.b16 %v1238
        %v1479 = vunpack.c.h.b16 %v1238
        %v1480 = vunpack.c.l.b16 %v1239
        %v1481 = vunpack.c.h.b16 %v1239
        %v1482 = vunpack.c.l.b16 %v1240
        %v1483 = vunpack.c.h.b16 %v1240
        %v1484 = vunpack.c.l.b16 %v1241
        %v1485 = vunpack.c.h.b16 %v1241
        %v1486 = vunpack.c.l.b16 %v1242
        %v1487 = vunpack.c.h.b16 %v1242
        %v1488 = vunpack.c.l.b16 %v1243
        %v1489 = vunpack.c.h.b16 %v1243
        %v1490 = vunpack.c.l.b16 %v1244
        %v1491 = vunpack.c.h.b16 %v1244
        %v1492 = vunpack.c.l.b16 %v1245
        %v1493 = vunpack.c.h.b16 %v1245
        %v1494 = vunpack.c.l.b16 %v1246
        %v1495 = vunpack.c.h.b16 %v1246
        %v1496 = vunpack.c.l.b16 %v1247
        %v1497 = vunpack.c.h.b16 %v1247
        %v1498 = vunpack.c.l.b16 %v1248
        %v1499 = vunpack.c.h.b16 %v1248
        %v1500 = vunpack.c.l.b16 %v1249
        %v1501 = vunpack.c.h.b16 %v1249
        %v1502 = vunpack.c.l.b16 %v1250
        %v1503 = vunpack.c.h.b16 %v1250
        %v1504 = vunpack.c.l.b16 %v1251
        %v1505 = vunpack.c.h.b16 %v1251
        %v1506 = vunpack.c.l.b16 %v1252
        %v1507 = vunpack.c.h.b16 %v1252
        %v1508 = vunpack.c.l.b16 %v1253
        %v1509 = vunpack.c.h.b16 %v1253
        %v1510 = vunpack.c.l.b16 %v1254
        %v1511 = vunpack.c.h.b16 %v1254
        %v1512 = vunpack.c.l.b16 %v1255
        %v1513 = vunpack.c.h.b16 %v1255
        %v1514 = vunpack.c.l.b16 %v1256
        %v1515 = vunpack.c.h.b16 %v1256
        %v1516 = vunpack.c.l.b16 %v1257
        %v1517 = vunpack.c.h.b16 %v1257
        %v1518 = vunpack.c.l.b16 %v1258
        %v1519 = vunpack.c.h.b16 %v1258
        %v1520 = vunpack.c.l.b16 %v1259
        %v1521 = vunpack.c.h.b16 %v1259
        %v1522 = vunpack.c.l.b16 %v1260
        %v1523 = vunpack.c.h.b16 %v1260
        %v1524 = vunpack.c.l.b16 %v1261
        %v1525 = vunpack.c.h.b16 %v1261
        %v1526 = vunpack.c.l.b16 %v1262
        %v1527 = vunpack.c.h.b16 %v1262
        %v1528 = vunpack.c.l.b16 %v1263
        %v1529 = vunpack.c.h.b16 %v1263
        %v1530 = vunpack.c.l.b16 %v1264
        %v1531 = vunpack.c.h.b16 %v1264
        %v1532 = vunpack.c.l.b16 %v1265
        %v1533 = vunpack.c.h.b16 %v1265
        %v1534 = vunpack.c.l.b16 %v1266
        %v1535 = vunpack.c.h.b16 %v1266
        %v1536 = vunpack.c.l.b16 %v1267
        %v1537 = vunpack.c.h.b16 %v1267
        %v1538 = vunpack.c.l.b16 %v1268
        %v1539 = vunpack.c.h.b16 %v1268
        %v1540 = vunpack.c.l.b16 %v1269
        %v1541 = vunpack.c.h.b16 %v1269
        %v1542 = vunpack.c.l.b16 %v1270
        %v1543 = vunpack.c.h.b16 %v1270
        %v1544 = vunpack.c.l.b16 %v1271
        %v1545 = vunpack.c.h.b16 %v1271
        %v1546 = vunpack.c.l.b16 %v1272
        %v1547 = vunpack.c.h.b16 %v1272
        %v1548 = vunpack.c.l.b16 %v1273
        %v1549 = vunpack.c.h.b16 %v1273
        %v1550 = vunpack.c.l.b16 %v1274
        %v1551 = vunpack.c.h.b16 %v1274
        %v1552 = vunpack.c.l.b16 %v1275
        %v1553 = vunpack.c.h.b16 %v1275
        %v1554 = vunpack.c.l.b16 %v1276
        %v1555 = vunpack.c.h.b16 %v1276
        %v1556 = vunpack.c.l.b16 %v1277
        %v1557 = vunpack.c.h.b16 %v1277
        %v1558 = vunpack.c.l.b16 %v1278
        %v1559 = vunpack.c.h.b16 %v1278
        %v1560 = vunpack.c.l.b16 %v1279
        %v1561 = vunpack.c.h.b16 %v1279
        %v1562 = vunpack.c.l.b16 %v1280
        %v1563 = vunpack.c.h.b16 %v1280
        %v1564 = vunpack.c.l.b16 %v1281
        %v1565 = vunpack.c.h.b16 %v1281
        %v1566 = vunpack.c.l.b16 %v1282
        %v1567 = vunpack.c.h.b16 %v1282
        %v1568 = vunpack.c.l.b16 %v1283
        %v1569 = vunpack.c.h.b16 %v1283
        %v1570 = vunpack.c.l.b16 %v1284
        %v1571 = vunpack.c.h.b16 %v1284
        %v1572 = vunpack.c.l.b16 %v1285
        %v1573 = vunpack.c.h.b16 %v1285
        %v1574 = vpack.c.b16 %v1384, %v1382
        %v1575 = vpack.c.b16 %v1385, %v1383
        %v1576 = vpack.c.b16 %v1388, %v1386
        %v1577 = vpack.c.b16 %v1389, %v1387
        %v1578 = vpack.c.b16 %v1392, %v1390
        %v1579 = vpack.c.b16 %v1393, %v1391
        %v1580 = vpack.c.b16 %v1396, %v1394
        %v1581 = vpack.c.b16 %v1397, %v1395
        %v1582 = vpack.c.b16 %v1400, %v1398
        %v1583 = vpack.c.b16 %v1401, %v1399
        %v1584 = vpack.c.b16 %v1404, %v1402
        %v1585 = vpack.c.b16 %v1405, %v1403
        %v1586 = vpack.c.b16 %v1408, %v1406
        %v1587 = vpack.c.b16 %v1409, %v1407
        %v1588 = vpack.c.b16 %v1412, %v1410
        %v1589 = vpack.c.b16 %v1413, %v1411
        %v1590 = vpack.c.b16 %v1416, %v1414
        %v1591 = vpack.c.b16 %v1417, %v1415
        %v1592 = vpack.c.b16 %v1420, %v1418
        %v1593 = vpack.c.b16 %v1421, %v1419
        %v1594 = vpack.c.b16 %v1424, %v1422
        %v1595 = vpack.c.b16 %v1425, %v1423
        %v1596 = vpack.c.b16 %v1428, %v1426
        %v1597 = vpack.c.b16 %v1429, %v1427
        %v1598 = vpack.c.b16 %v1432, %v1430
        %v1599 = vpack.c.b16 %v1433, %v1431
        %v1600 = vpack.c.b16 %v1436, %v1434
        %v1601 = vpack.c.b16 %v1437, %v1435
        %v1602 = vpack.c.b16 %v1440, %v1438
        %v1603 = vpack.c.b16 %v1441, %v1439
        %v1604 = vpack.c.b16 %v1444, %v1442
        %v1605 = vpack.c.b16 %v1445, %v1443
        %v1606 = vpack.c.b16 %v1448, %v1446
        %v1607 = vpack.c.b16 %v1449, %v1447
        %v1608 = vpack.c.b16 %v1452, %v1450
        %v1609 = vpack.c.b16 %v1453, %v1451
        %v1610 = vpack.c.b16 %v1456, %v1454
        %v1611 = vpack.c.b16 %v1457, %v1455
        %v1612 = vpack.c.b16 %v1460, %v1458
        %v1613 = vpack.c.b16 %v1461, %v1459
        %v1614 = vpack.c.b16 %v1464, %v1462
        %v1615 = vpack.c.b16 %v1465, %v1463
        %v1616 = vpack.c.b16 %v1468, %v1466
        %v1617 = vpack.c.b16 %v1469, %v1467
        %v1618 = vpack.c.b16 %v1472, %v1470
        %v1619 = vpack.c.b16 %v1473, %v1471
        %v1620 = vpack.c.b16 %v1476, %v1474
        %v1621 = vpack.c.b16 %v1477, %v1475
        %v1622 = vpack.c.b16 %v1480, %v1478
        %v1623 = vpack.c.b16 %v1481, %v1479
        %v1624 = vpack.c.b16 %v1484, %v1482
        %v1625 = vpack.c.b16 %v1485, %v1483
        %v1626 = vpack.c.b16 %v1488, %v1486
        %v1627 = vpack.c.b16 %v1489, %v1487
        %v1628 = vpack.c.b16 %v1492, %v1490
        %v1629 = vpack.c.b16 %v1493, %v1491
        %v1630 = vpack.c.b16 %v1496, %v1494
        %v1631 = vpack.c.b16 %v1497, %v1495
        %v1632 = vpack.c.b16 %v1500, %v1498
        %v1633 = vpack.c.b16 %v1501, %v1499
        %v1634 = vpack.c.b16 %v1504, %v1502
        %v1635 = vpack.c.b16 %v1505, %v1503
        %v1636 = vpack.c.b16 %v1508, %v1506
        %v1637 = vpack.c.b16 %v1509, %v1507
        %v1638 = vpack.c.b16 %v1512, %v1510
        %v1639 = vpack.c.b16 %v1513, %v1511
        %v1640 = vpack.c.b16 %v1516, %v1514
        %v1641 = vpack.c.b16 %v1517, %v1515
        %v1642 = vpack.c.b16 %v1520, %v1518
        %v1643 = vpack.c.b16 %v1521, %v1519
        %v1644 = vpack.c.b16 %v1524, %v1522
        %v1645 = vpack.c.b16 %v1525, %v1523
        %v1646 = vpack.c.b16 %v1528, %v1526
        %v1647 = vpack.c.b16 %v1529, %v1527
        %v1648 = vpack.c.b16 %v1532, %v1530
        %v1649 = vpack.c.b16 %v1533, %v1531
        %v1650 = vpack.c.b16 %v1536, %v1534
        %v1651 = vpack.c.b16 %v1537, %v1535
        %v1652 = vpack.c.b16 %v1540, %v1538
        %v1653 = vpack.c.b16 %v1541, %v1539
        %v1654 = vpack.c.b16 %v1544, %v1542
        %v1655 = vpack.c.b16 %v1545, %v1543
        %v1656 = vpack.c.b16 %v1548, %v1546
        %v1657 = vpack.c.b16 %v1549, %v1547
        %v1658 = vpack.c.b16 %v1552, %v1550
        %v1659 = vpack.c.b16 %v1553, %v1551
        %v1660 = vpack.c.b16 %v1556, %v1554
        %v1661 = vpack.c.b16 %v1557, %v1555
        %v1662 = vpack.c.b16 %v1560, %v1558
        %v1663 = vpack.c.b16 %v1561, %v1559
        %v1664 = vpack.c.b16 %v1564, %v1562
        %v1665 = vpack.c.b16 %v1565, %v1563
        %v1666 = vpack.c.b16 %v1568, %v1566
        %v1667 = vpack.c.b16 %v1569, %v1567
        %v1668 = vpack.c.b16 %v1572, %v1570
        %v1669 = vpack.c.b16 %v1573, %v1571
        %1766 = vmatprep.subr.bf16.mxu0 %v1589
        %1767 = vmatpush1.bf16.msra.mxu0 %v1588
        %1768 = vmatprep.subr.bf16.mxu0 %v1587
        %1769 = vmatpush1.bf16.msra.mxu0 %v1586
        %1770 = vmatprep.subr.bf16.mxu0 %v1585
        %1771 = vmatpush1.bf16.msra.mxu0 %v1584
        %1772 = vmatprep.subr.bf16.mxu0 %v1583
        %1773 = vmatpush1.bf16.msra.mxu0 %v1582
        %1774 = vmatprep.subr.bf16.mxu0 %v1581
        %1775 = vmatpush1.bf16.msra.mxu0 %v1580
        %1776 = vmatprep.subr.bf16.mxu0 %v1579
        %1777 = vmatpush1.bf16.msra.mxu0 %v1578
        %1778 = vmatprep.subr.bf16.mxu0 %v1577
        %1779 = vmatpush1.bf16.msra.mxu0 %v1576
        %1780 = vmatprep.subr.bf16.mxu0 %v1575
        %1781 = vmatpush1.bf16.msra.mxu0 %v1574
        %1782 = vmatprep.subr.bf16.mxu0 %v1605
        %1783 = vmatpush2.bf16.msra.mxu0 %v1604
        %1784 = vmatprep.subr.bf16.mxu0 %v1603
        %1785 = vmatpush2.bf16.msra.mxu0 %v1602
        %1786 = vmatprep.subr.bf16.mxu0 %v1601
        %1787 = vmatpush2.bf16.msra.mxu0 %v1600
        %1788 = vmatprep.subr.bf16.mxu0 %v1599
        %1789 = vmatpush2.bf16.msra.mxu0 %v1598
        %1790 = vmatprep.subr.bf16.mxu0 %v1597
        %1791 = vmatpush2.bf16.msra.mxu0 %v1596
        %1792 = vmatprep.subr.bf16.mxu0 %v1595
        %1793 = vmatpush2.bf16.msra.mxu0 %v1594
        %1794 = vmatprep.subr.bf16.mxu0 %v1593
        %1795 = vmatpush2.bf16.msra.mxu0 %v1592
        %1796 = vmatprep.subr.bf16.mxu0 %v1591
        %1797 = vmatpush2.bf16.msra.mxu0 %v1590
        %1798 = vmatprep.mubr.bf16.mxu0 %v1185
        %1799 = vmatmul.mubr.bf16.gmra.mxu0 %v1184
        %v1800 = vpop.f32.mrf.mxu0
        %v1801 = vadd.f32 0.0, %v1800
        %v1802 = vpop.f32.mrf.mxu0
        %v1803 = vadd.f32 0.0, %v1802
        %v1804 = vpop.f32.mrf.mxu0
        %v1805 = vadd.f32 0.0, %v1804
        %v1806 = vpop.f32.mrf.mxu0
        %v1807 = vadd.f32 0.0, %v1806
        %1808 = vdwg.mxu0
        %1809 = vmatprep.subr.bf16.mxu0 %v1621
        %1810 = vmatpush1.bf16.msra.mxu0 %v1620
        %1811 = vmatprep.subr.bf16.mxu0 %v1619
        %1812 = vmatpush1.bf16.msra.mxu0 %v1618
        %1813 = vmatprep.subr.bf16.mxu0 %v1617
        %1814 = vmatpush1.bf16.msra.mxu0 %v1616
        %1815 = vmatprep.subr.bf16.mxu0 %v1615
        %1816 = vmatpush1.bf16.msra.mxu0 %v1614
        %1817 = vmatprep.subr.bf16.mxu0 %v1613
        %1818 = vmatpush1.bf16.msra.mxu0 %v1612
        %1819 = vmatprep.subr.bf16.mxu0 %v1611
        %1820 = vmatpush1.bf16.msra.mxu0 %v1610
        %1821 = vmatprep.subr.bf16.mxu0 %v1609
        %1822 = vmatpush1.bf16.msra.mxu0 %v1608
        %1823 = vmatprep.subr.bf16.mxu0 %v1607
        %1824 = vmatpush1.bf16.msra.mxu0 %v1606
        %1825 = vmatprep.subr.bf16.mxu0 %v1637
        %1826 = vmatpush2.bf16.msra.mxu0 %v1636
        %1827 = vmatprep.subr.bf16.mxu0 %v1635
        %1828 = vmatpush2.bf16.msra.mxu0 %v1634
        %1829 = vmatprep.subr.bf16.mxu0 %v1633
        %1830 = vmatpush2.bf16.msra.mxu0 %v1632
        %1831 = vmatprep.subr.bf16.mxu0 %v1631
        %1832 = vmatpush2.bf16.msra.mxu0 %v1630
        %1833 = vmatprep.subr.bf16.mxu0 %v1629
        %1834 = vmatpush2.bf16.msra.mxu0 %v1628
        %1835 = vmatprep.subr.bf16.mxu0 %v1627
        %1836 = vmatpush2.bf16.msra.mxu0 %v1626
        %1837 = vmatprep.subr.bf16.mxu0 %v1625
        %1838 = vmatpush2.bf16.msra.mxu0 %v1624
        %1839 = vmatprep.subr.bf16.mxu0 %v1623
        %1840 = vmatpush2.bf16.msra.mxu0 %v1622
        %1841 = vmatprep.mubr.bf16.mxu0 %v1187
        %1842 = vmatmul.mubr.bf16.gmra.mxu0 %v1186
        %v1843 = vpop.f32.mrf.mxu0
        %v1844 = vadd.f32 %v1801, %v1843
        %v1845 = vpop.f32.mrf.mxu0
        %v1846 = vadd.f32 %v1803, %v1845
        %v1847 = vpop.f32.mrf.mxu0
        %v1848 = vadd.f32 %v1805, %v1847
        %v1849 = vpop.f32.mrf.mxu0
        %v1850 = vadd.f32 %v1807, %v1849
        %1851 = vdwg.mxu0
        %1852 = vmatprep.subr.bf16.mxu0 %v1653
        %1853 = vmatpush1.bf16.msra.mxu0 %v1652
        %1854 = vmatprep.subr.bf16.mxu0 %v1651
        %1855 = vmatpush1.bf16.msra.mxu0 %v1650
        %1856 = vmatprep.subr.bf16.mxu0 %v1649
        %1857 = vmatpush1.bf16.msra.mxu0 %v1648
        %1858 = vmatprep.subr.bf16.mxu0 %v1647
        %1859 = vmatpush1.bf16.msra.mxu0 %v1646
        %1860 = vmatprep.subr.bf16.mxu0 %v1645
        %1861 = vmatpush1.bf16.msra.mxu0 %v1644
        %1862 = vmatprep.subr.bf16.mxu0 %v1643
        %1863 = vmatpush1.bf16.msra.mxu0 %v1642
        %1864 = vmatprep.subr.bf16.mxu0 %v1641
        %1865 = vmatpush1.bf16.msra.mxu0 %v1640
        %1866 = vmatprep.subr.bf16.mxu0 %v1639
        %1867 = vmatpush1.bf16.msra.mxu0 %v1638
        %1868 = vmatprep.subr.bf16.mxu0 %v1669
        %1869 = vmatpush2.bf16.msra.mxu0 %v1668
        %1870 = vmatprep.subr.bf16.mxu0 %v1667
        %1871 = vmatpush2.bf16.msra.mxu0 %v1666
        %1872 = vmatprep.subr.bf16.mxu0 %v1665
        %1873 = vmatpush2.bf16.msra.mxu0 %v1664
        %1874 = vmatprep.subr.bf16.mxu0 %v1663
        %1875 = vmatpush2.bf16.msra.mxu0 %v1662
        %1876 = vmatprep.subr.bf16.mxu0 %v1661
        %1877 = vmatpush2.bf16.msra.mxu0 %v1660
        %1878 = vmatprep.subr.bf16.mxu0 %v1659
        %1879 = vmatpush2.bf16.msra.mxu0 %v1658
        %1880 = vmatprep.subr.bf16.mxu0 %v1657
        %1881 = vmatpush2.bf16.msra.mxu0 %v1656
        %1882 = vmatprep.subr.bf16.mxu0 %v1655
        %1883 = vmatpush2.bf16.msra.mxu0 %v1654
        %1884 = vmatprep.mubr.bf16.mxu0 %v1189
        %1885 = vmatmul.mubr.bf16.gmra.mxu0 %v1188
        %v1886 = vpop.f32.mrf.mxu0
        %v1887 = vadd.f32 %v1844, %v1886
        %v1888 = vpop.f32.mrf.mxu0
        %v1889 = vadd.f32 %v1846, %v1888
        %v1890 = vpop.f32.mrf.mxu0
        %v1891 = vadd.f32 %v1848, %v1890
        %v1892 = vpop.f32.mrf.mxu0
        %v1893 = vadd.f32 %v1850, %v1892
        %1894 = vdwg.mxu0
        %v1895 = vld [vmem:[%s5] sm:$0x3]
        %v1897 = vlaneseq
        %v1898 = vshrl.u32 %v1897, 7
        %v1899 = vsub.s32 0, %v1898
        %v1900 = vrot.slane %v1895, %v1899
        %v1901 = vlaneseq
        %v1902 = vshrl.u32 %v1901, 7
        %v1903 = vsub.s32 1, %v1902
        %v1904 = vrot.slane %v1895, %v1903
        %v1907 = vmul.f32 %v1887, %v1900
        %v1908 = vmul.f32 %v1889, %v1904
        %v1909 = vmul.f32 %v1891, %v1900
        %v1910 = vmul.f32 %v1893, %v1904
        %v1911 = vld [vmem:[%s6] sm:$0x3]
        %v1913 = vlaneseq
        %v1914 = vshrl.u32 %v1913, 7
        %v1915 = vsub.s32 0, %v1914
        %v1916 = vrot.slane %v1911, %v1915
        %v1917 = vlaneseq
        %v1918 = vshrl.u32 %v1917, 7
        %v1919 = vsub.s32 1, %v1918
        %v1920 = vrot.slane %v1911, %v1919
        %v1923 = vadd.f32 %v1907, %v1916
        %v1924 = vadd.f32 %v1908, %v1920
        %v1925 = vadd.f32 %v1909, %v1916
        %v1926 = vadd.f32 %v1910, %v1920
        %v1927 = vadd.f32 %v1923, %v326
        %v1928 = vadd.f32 %v1924, %v327
        %v1929 = vadd.f32 %v1925, %v328
        %v1930 = vadd.f32 %v1926, %v329
        %v1931 = vmax.f32 %v1927, 0.0
        %v1932 = vmax.f32 %v1928, 0.0
        %v1933 = vmax.f32 %v1929, 0.0
        %v1934 = vmax.f32 %v1930, 0.0
        %1935 = vst [vmem:[%s325] sm:$0xff] %v1931
        %1936 = vst [vmem:[%s325 + $0x8] sm:$0xff] %v1932
        %1937 = vst [vmem:[%s325 + $0x10] sm:$0xff] %v1933
        %1938 = vst [vmem:[%s325 + $0x18] sm:$0xff] %v1934
        %s1939 = sand.u32 %s185, 1
        %s1940 = scalar_lea.sflag [#allocation4], %s1939
        %s1941 = sand.u32 %s185, 1
        %s1942 = smul.addr %s1941, 32
        %s1943 = scalar_lea.vmem [#allocation8], %s1942
        // Predicated region
        $region61: #{tpu_custom_call.1} parent=47 // pred_check
          %p1944 = pneg %p195
        $region62: #{tpu_custom_call.1} parent=47 // pred_check_branch
          %1946 = sbr.rel (%p1944) target = $region64
        $region63: #{tpu_custom_call.1} parent=47 // pred_region
          %s1948 = ssub.s32 512, 512
          %1949 = vsyncadd %s1940, %s1948
          %s1950 = smul.addr %s25, 4
          %s1951 = smul.addr %s1950, 128
          %s1952 = scalar_lea.hbm %s7, %s1951
          %s1953 = sshll.u32 %s1943, 4
          %s1954 = int_to_ptr.vmem [resolvable:$true] %s1953
          %1959 = dma.vmem_to_hbm [thread:$0]  %s1954, 512, %s1952, %s1940, 256, 256, 16
        $region64: #{tpu_custom_call.1} parent=47 // pred_fallthru
          _
      $region48: #{tpu_custom_call.1} parent=5 // pred_fallthru
        _
      %p1960 = scmp.le.s32.totalorder 2, %s20
      // Predicated region
      $region65: #{tpu_custom_call.1} parent=5 // pred_check
        %p1961 = pneg %p1960
      $region66: #{tpu_custom_call.1} parent=5 // pred_check_branch
        %1963 = sbr.rel (%p1961) target = $region68
      $region67: #{tpu_custom_call.1} parent=5 // pred_region
        %s1964 = ssub.s32 %s20, 2
        // Predicated region
        $region69: #{tpu_custom_call.1} parent=67 // pred_check
          %p1965 = pneg %p201
        $region70: #{tpu_custom_call.1} parent=67 // pred_check_branch
          %1967 = sbr.rel (%p1965) target = $region72
        $region71: #{tpu_custom_call.1} parent=67 // pred_region
          %s1968 = sand.u32 %s186, 1
          %s1969 = scalar_lea.sflag [#allocation4], %s1968
          %s1970 = sand.u32 %s186, 1
          %s1971 = smul.addr %s1970, 32
          %s1972 = scalar_lea.vmem [#allocation8], %s1971
          %1973 = dma.done %s1969, 512
        $region72: #{tpu_custom_call.1} parent=67 // pred_fallthru
          _
      $region68: #{tpu_custom_call.1} parent=5 // pred_fallthru
        _
    $region6: #{tpu_custom_call.1} parent=1 // loop_footer
      %s24 = sadd.s32 1, %s20
    $region7: #{tpu_custom_call.1} parent=1 // loop_footer_branch
      %19 = sbr.rel target = $region3
    $region8: #{tpu_custom_call.1} parent=1 // loop_exit
      _
    %1974 = vsyncpa [#allocation3], 1
    %s1975 = scalar_lea.sflag [#allocation3], 1
    %1976 = vsyncpa %s1975, 1
    %1977 = vsyncpa [#allocation6], 1
    %1978 = vsyncpa [#allocation4], 1
    %s1979 = scalar_lea.sflag [#allocation4], 1
    %1980 = vsyncpa %s1979, 1

</llo_original>
